<compile_context>
chip_gen: v7x
topology: tpu7x:2x2x1
jax: 0.10.0
libtpu: 0.0.40
codegen_flags: <defaults>
</compile_context>

<pallas_src>
from functools import partial

import jax
import jax.numpy as jnp
from jax import lax
from jax.experimental import pallas as pl
from jax.experimental.pallas import tpu as pltpu  # noqa: F401  (TPU backend)


# ---------------------------------------------------------------------------
# Fused Pallas kernel: upconv2x2 -> (conv3x3 + BN + LeakyReLU) x 2
# Activations are packed rows (N*H, W*C); everything lives in VMEM.
# ---------------------------------------------------------------------------
def _upconv_fused_kernel(
        x_ref,     # (N*Hin, Win*Cin)       packed input rows
        u0_ref,    # (Win*Cin, W1*Cin)      upconv weights producing ky=0 rows
        u1_ref,    # (Win*Cin, W1*Cin)      upconv weights producing ky=1 rows
        perm_ref,  # (N*H1, N*H1)           even/odd row-interleave permutation
        ub_ref,    # (1, W1*Cin)            upconv bias, tiled over W1
        sup_ref,   # (N*H1, N*H1)           "row above" selector (boundary-masked)
        sdn_ref,   # (N*H1, N*H1)           "row below" selector (boundary-masked)
        t1_ref,    # (3*W1*Cin, W1*Cout)    conv1 block-Toeplitz weights
        s1_ref,    # (1, W1*Cout)           conv1 folded BN scale (tiled over W1)
        b1_ref,    # (1, W1*Cout)           conv1 folded BN bias  (tiled over W1)
        t2_ref,    # (3*W1*Cout, W1*Cout)   conv2 block-Toeplitz weights
        s2_ref,    # (1, W1*Cout)
        b2_ref,    # (1, W1*Cout)
        out_ref):  # (N*H1, W1*Cout)        packed output rows (lane-dense)
    f32 = jnp.float32
    x = x_ref[...].astype(f32)

    # --- ConvTranspose2d(kernel=2, stride=2):  out_row[2i+ky] = x_row[i] @ U[ky]
    even = jnp.dot(x, u0_ref[...], preferred_element_type=f32)   # rows 2i
    odd = jnp.dot(x, u1_ref[...], preferred_element_type=f32)    # rows 2i+1
    up = jnp.dot(perm_ref[...], jnp.concatenate([even, odd], axis=0),
                 preferred_element_type=f32) + ub_ref[...]

    def conv_bn_lrelu(a, t_ref, s_ref, b_ref):
        # Vertical taps: rows above / below each row, with per-image boundary
        # zeroing folded into the constant selectors -> pure MXU, no relayouts.
        a_up = jnp.dot(sup_ref[...], a, preferred_element_type=f32)
        a_dn = jnp.dot(sdn_ref[...], a, preferred_element_type=f32)
        # Horizontal taps + W-padding live inside the block-Toeplitz weights,
        # so the whole 3x3 conv collapses into a single lane-dense matmul.
        im2col = jnp.concatenate([a_up, a, a_dn], axis=1)
        acc = jnp.dot(im2col, t_ref[...], preferred_element_type=f32)
        y = acc * s_ref[...] + b_ref[...]          # folded BN (+ conv bias)
        return jnp.where(y >= 0, y, 0.01 * y)      # LeakyReLU(0.01)

    a1 = conv_bn_lrelu(up, t1_ref, s1_ref, b1_ref)
    y2 = conv_bn_lrelu(a1, t2_ref, s2_ref, b2_ref)
    out_ref[...] = y2.astype(out_ref.dtype)


# ---------------------------------------------------------------------------
# One-time glue: BN folding + constant matrix construction
# ---------------------------------------------------------------------------
def _fold_bn(p, eps):
    scale = p["gamma"] / jnp.sqrt(p["var"] + eps)
    bias = p["beta"] + scale * (p["b"] - p["mean"])
    return scale, bias


def _conv_toeplitz(w_hwio, width):
    """(3,3,Cin,Cout) -> (3*width*Cin, width*Cout) block-Toeplitz matrix.

    Block dy, entry [wi*Cin+ci, wo*Cout+co] = w[dy, dx, ci, co] with
    wi = wo + dx - 1 (pad=1); out-of-range horizontal taps are dropped,
    which implements the zero padding along W.
    """
    mats = []
    for dy in range(3):
        t = sum(jnp.kron(jnp.eye(width, k=1 - dx, dtype=jnp.float32),
                         w_hwio[dy, dx]) for dx in range(3))
        mats.append(t)
    return jnp.concatenate(mats, axis=0)


def _upconv_mats(wt, win):
    """ConvTranspose2d weights (Cin, Co, 2, 2) -> U[ky] of shape (win*Cin, 2*win*Co).

    U[ky][j*Cin + ci, (2j+kx)*Co + co] = wt[ci, co, ky, kx]
    """
    mats = []
    for ky in range(2):
        u = 0.0
        for kx in range(2):
            sel = jnp.zeros((win, 2 * win), jnp.float32)
            sel = sel.at[jnp.arange(win), 2 * jnp.arange(win) + kx].set(1.0)
            u = u + jnp.kron(sel, wt[:, :, ky, kx])
        mats.append(u)
    return mats


def _row_selectors(n, h):
    """Constant matrices fetching the row above / below within each image."""
    nh = n * h
    r = jnp.arange(nh)
    keep_up = ((r % h) != 0).astype(jnp.float32)[:, None]
    keep_dn = ((r % h) != (h - 1)).astype(jnp.float32)[:, None]
    s_up = jnp.eye(nh, k=-1, dtype=jnp.float32) * keep_up
    s_dn = jnp.eye(nh, k=1, dtype=jnp.float32) * keep_dn
    return s_up, s_dn


def _interleave_perm(n, h_in):
    """Permutation taking [even rows; odd rows] -> row-interleaved layout."""
    nh_out = n * 2 * h_in
    r = jnp.arange(nh_out)
    src = (r % 2) * (n * h_in) + r // 2
    return jnp.zeros((nh_out, nh_out), jnp.float32).at[r, src].set(1.0)


def prepare_kernel_constants(params, n, hin, win):
    """Fold BN, build Toeplitz / selector / permutation matrices (runs once)."""
    cin = params["wt"].shape[0]
    cout = params["conv1"]["w"].shape[-1]
    h1, w1 = 2 * hin, 2 * win
    eps = params["eps"]

    u0, u1 = _upconv_mats(params["wt"], win)
    ub_row = jnp.tile(params["bt"], w1).reshape(1, w1 * cin)
    perm = _interleave_perm(n, hin)
    s_up, s_dn = _row_selectors(n, h1)

    t1 = _conv_toeplitz(params["conv1"]["w"], w1)
    t2 = _conv_toeplitz(params["conv2"]["w"], w1)
    sc1, bi1 = _fold_bn(params["conv1"], eps)
    sc2, bi2 = _fold_bn(params["conv2"], eps)
    s1_row = jnp.tile(sc1, w1).reshape(1, w1 * cout)
    b1_row = jnp.tile(bi1, w1).reshape(1, w1 * cout)
    s2_row = jnp.tile(sc2, w1).reshape(1, w1 * cout)
    b2_row = jnp.tile(bi2, w1).reshape(1, w1 * cout)

    return (u0, u1, perm, ub_row, s_up, s_dn,
            t1, s1_row, b1_row, t2, s2_row, b2_row)


# ---------------------------------------------------------------------------
# Public forward (NCHW in / NCHW out, matching the PyTorch module)
# ---------------------------------------------------------------------------
def upconv_forward(x_nchw, consts):
    n, cin, hin, win = x_nchw.shape
    h1, w1 = 2 * hin, 2 * win
    cout = consts[6].shape[-1] // w1   # from conv1 Toeplitz weights

    # NCHW -> packed rows (N*Hin, Win*Cin): lane axis carries W*C (lane-dense).
    x_pk = jnp.transpose(x_nchw, (0, 2, 3, 1)).reshape(n * hin, win * cin)

    y_pk = pl.pallas_call(
        _upconv_fused_kernel,
        out_shape=jax.ShapeDtypeStruct((n * h1, w1 * cout), jnp.float32),
    )(x_pk, *consts)

    y = y_pk.reshape(n, h1, w1, cout)       # free: same memory order
    return jnp.transpose(y, (0, 3, 1, 2))   # NHWC -> NCHW


# ---------------------------------------------------------------------------
# Deterministic synthetic parameters + pure-JAX reference
# ---------------------------------------------------------------------------
def make_params(key, cin, cout, eps=1e-5):
    ks = jax.random.split(key, 4)

    def conv_bn(k, ci, co):
        kk = jax.random.split(k, 6)
        return dict(
            w=0.15 * jax.random.normal(kk[0], (3, 3, ci, co), jnp.float32),  # HWIO
            b=0.1 * jax.random.normal(kk[1], (co,), jnp.float32),
            gamma=1.0 + 0.1 * jax.random.normal(kk[2], (co,), jnp.float32),
            beta=0.1 * jax.random.normal(kk[3], (co,), jnp.float32),
            mean=0.1 * jax.random.normal(kk[4], (co,), jnp.float32),
            var=jax.random.uniform(kk[5], (co,), jnp.float32, 0.5, 1.5),
        )

    return dict(
        # ConvTranspose2d(cin, cin, kernel_size=2, stride=2): weight (Cin, Cin, 2, 2)
        wt=0.2 * jax.random.normal(ks[0], (cin, cin, 2, 2), jnp.float32),
        bt=0.1 * jax.random.normal(ks[1], (cin,), jnp.float32),
        conv1=conv_bn(ks[2], cin, cout),
        conv2=conv_bn(ks[3], cout, cout),
        eps=eps,
    )


def upconv_reference(x_nchw, params):
    """Independent XLA reference (same math, inference-mode BN)."""
    x = jnp.transpose(x_nchw, (0, 2, 3, 1))                      # NHWC
    wt, bt, eps = params["wt"], params["bt"], params["eps"]
    # ConvTranspose2d(kernel=2, stride=2): out[n, 2i+ky, 2j+kx, co]
    y = jnp.einsum("nhwc,cokl->nhkwlo", x, wt)
    n, hin, _, win, _, co = y.shape
    y = y.reshape(n, 2 * hin, 2 * win, co) + bt
    for p in (params["conv1"], params["conv2"]):
        y = lax.conv_general_dilated(
            y, p["w"], window_strides=(1, 1), padding=((1, 1), (1, 1)),
            dimension_numbers=("NHWC", "HWIO", "NHWC"))
        scale = p["gamma"] / jnp.sqrt(p["var"] + eps)
        bias = p["beta"] + scale * (p["b"] - p["mean"])
        y = y * scale + bias
        y = jnp.where(y >= 0, y, 0.01 * y)
    return jnp.transpose(y, (0, 3, 1, 2))


# ---------------------------------------------------------------------------
if __name__ == "__main__":
    key = jax.random.PRNGKey(0)
    k_x, k_p = jax.random.split(key)

    N, Cin, Cout, Hin, Win = 2, 4, 8, 16, 16
    x = jax.random.normal(k_x, (N, Cin, Hin, Win), jnp.float32)
    params = make_params(k_p, Cin, Cout)

    consts = prepare_kernel_constants(params, N, Hin, Win)
    fwd = jax.jit(upconv_forward)

    out = jax.block_until_ready(fwd(x, consts))
    ref = jax.block_until_ready(upconv_reference(x, params))

    assert out.shape == (N, Cout, 2 * Hin, 2 * Win), out.shape
    max_diff = float(jnp.max(jnp.abs(out - ref)))
    assert jnp.allclose(out, ref, atol=1e-3, rtol=1e-3), f"max abs diff {max_diff}"
    print("KERNEL_OK")
</pallas_src>

<mosaic_0001>
module attributes {stable_mosaic.version = 11 : i64} {
  func.func @_upconv_fused_kernel(%arg0: memref<32x64xf32, #tpu.memory_space<vmem>>, %arg1: memref<64x128xf32, #tpu.memory_space<vmem>>, %arg2: memref<64x128xf32, #tpu.memory_space<vmem>>, %arg3: memref<64x64xf32, #tpu.memory_space<vmem>>, %arg4: memref<1x128xf32, #tpu.memory_space<vmem>>, %arg5: memref<64x64xf32, #tpu.memory_space<vmem>>, %arg6: memref<64x64xf32, #tpu.memory_space<vmem>>, %arg7: memref<384x256xf32, #tpu.memory_space<vmem>>, %arg8: memref<1x256xf32, #tpu.memory_space<vmem>>, %arg9: memref<1x256xf32, #tpu.memory_space<vmem>>, %arg10: memref<768x256xf32, #tpu.memory_space<vmem>>, %arg11: memref<1x256xf32, #tpu.memory_space<vmem>>, %arg12: memref<1x256xf32, #tpu.memory_space<vmem>>, %arg13: memref<64x256xf32, #tpu.memory_space<vmem>>) attributes {dimension_semantics = [], scalar_prefetch = 0 : i64, scratch_operands = 0 : i64, tpu.core_type = #tpu.core_type<tc>} {
    %c0 = arith.constant 0 : index
    %c0_0 = arith.constant 0 : index
    %0 = vector.load %arg0[%c0, %c0_0] : memref<32x64xf32, #tpu.memory_space<vmem>>, vector<32x64xf32>
    %c0_1 = arith.constant 0 : index
    %c0_2 = arith.constant 0 : index
    %1 = vector.load %arg1[%c0_1, %c0_2] : memref<64x128xf32, #tpu.memory_space<vmem>>, vector<64x128xf32>
    %cst = arith.constant dense<0.000000e+00> : vector<32x128xf32>
    %2 = tpu.matmul %0, %1, %cst {dimension_numbers = #tpu.dot_dimension_numbers<[1], [0], [0], [1], [0, 0, 1, 1], [], []>} : vector<32x64xf32>, vector<64x128xf32>, vector<32x128xf32> -> vector<32x128xf32>
    %c0_3 = arith.constant 0 : index
    %c0_4 = arith.constant 0 : index
    %3 = vector.load %arg2[%c0_3, %c0_4] : memref<64x128xf32, #tpu.memory_space<vmem>>, vector<64x128xf32>
    %cst_5 = arith.constant dense<0.000000e+00> : vector<32x128xf32>
    %4 = tpu.matmul %0, %3, %cst_5 {dimension_numbers = #tpu.dot_dimension_numbers<[1], [0], [0], [1], [0, 0, 1, 1], [], []>} : vector<32x64xf32>, vector<64x128xf32>, vector<32x128xf32> -> vector<32x128xf32>
    %c0_6 = arith.constant 0 : index
    %c0_7 = arith.constant 0 : index
    %5 = vector.load %arg3[%c0_6, %c0_7] : memref<64x64xf32, #tpu.memory_space<vmem>>, vector<64x64xf32>
    %6 = tpu.concatenate %2, %4 in 0 : vector<32x128xf32>, vector<32x128xf32> -> vector<64x128xf32>
    %cst_8 = arith.constant dense<0.000000e+00> : vector<64x128xf32>
    %7 = tpu.matmul %5, %6, %cst_8 {dimension_numbers = #tpu.dot_dimension_numbers<[1], [0], [0], [1], [0, 0, 1, 1], [], []>} : vector<64x64xf32>, vector<64x128xf32>, vector<64x128xf32> -> vector<64x128xf32>
    %c0_9 = arith.constant 0 : index
    %c0_10 = arith.constant 0 : index
    %8 = vector.load %arg4[%c0_9, %c0_10] : memref<1x128xf32, #tpu.memory_space<vmem>>, vector<1x128xf32>
    %9 = vector.broadcast %8 : vector<1x128xf32> to vector<64x128xf32>
    %10 = arith.addf %7, %9 : vector<64x128xf32>
    %c0_11 = arith.constant 0 : index
    %c0_12 = arith.constant 0 : index
    %11 = vector.load %arg5[%c0_11, %c0_12] : memref<64x64xf32, #tpu.memory_space<vmem>>, vector<64x64xf32>
    %cst_13 = arith.constant dense<0.000000e+00> : vector<64x128xf32>
    %12 = tpu.matmul %11, %10, %cst_13 {dimension_numbers = #tpu.dot_dimension_numbers<[1], [0], [0], [1], [0, 0, 1, 1], [], []>} : vector<64x64xf32>, vector<64x128xf32>, vector<64x128xf32> -> vector<64x128xf32>
    %c0_14 = arith.constant 0 : index
    %c0_15 = arith.constant 0 : index
    %13 = vector.load %arg6[%c0_14, %c0_15] : memref<64x64xf32, #tpu.memory_space<vmem>>, vector<64x64xf32>
    %cst_16 = arith.constant dense<0.000000e+00> : vector<64x128xf32>
    %14 = tpu.matmul %13, %10, %cst_16 {dimension_numbers = #tpu.dot_dimension_numbers<[1], [0], [0], [1], [0, 0, 1, 1], [], []>} : vector<64x64xf32>, vector<64x128xf32>, vector<64x128xf32> -> vector<64x128xf32>
    %15 = tpu.concatenate %12, %10, %14 in 1 : vector<64x128xf32>, vector<64x128xf32>, vector<64x128xf32> -> vector<64x384xf32>
    %c0_17 = arith.constant 0 : index
    %c0_18 = arith.constant 0 : index
    %16 = vector.load %arg7[%c0_17, %c0_18] : memref<384x256xf32, #tpu.memory_space<vmem>>, vector<384x256xf32>
    %cst_19 = arith.constant dense<0.000000e+00> : vector<64x256xf32>
    %17 = tpu.matmul %15, %16, %cst_19 {dimension_numbers = #tpu.dot_dimension_numbers<[1], [0], [0], [1], [0, 0, 1, 1], [], []>} : vector<64x384xf32>, vector<384x256xf32>, vector<64x256xf32> -> vector<64x256xf32>
    %c0_20 = arith.constant 0 : index
    %c0_21 = arith.constant 0 : index
    %18 = vector.load %arg8[%c0_20, %c0_21] : memref<1x256xf32, #tpu.memory_space<vmem>>, vector<1x256xf32>
    %19 = vector.broadcast %18 : vector<1x256xf32> to vector<64x256xf32>
    %20 = arith.mulf %17, %19 : vector<64x256xf32>
    %c0_22 = arith.constant 0 : index
    %c0_23 = arith.constant 0 : index
    %21 = vector.load %arg9[%c0_22, %c0_23] : memref<1x256xf32, #tpu.memory_space<vmem>>, vector<1x256xf32>
    %22 = vector.broadcast %21 : vector<1x256xf32> to vector<64x256xf32>
    %23 = arith.addf %20, %22 : vector<64x256xf32>
    %cst_24 = arith.constant 0.000000e+00 : f32
    %24 = vector.broadcast %cst_24 : f32 to vector<64x256xf32>
    %25 = arith.cmpf oge, %23, %24 : vector<64x256xf32>
    %cst_25 = arith.constant 0.00999999977 : f32
    %26 = vector.broadcast %cst_25 : f32 to vector<64x256xf32>
    %27 = arith.mulf %26, %23 : vector<64x256xf32>
    %28 = arith.select %25, %23, %27 : vector<64x256xi1>, vector<64x256xf32>
    %c0_26 = arith.constant 0 : index
    %c0_27 = arith.constant 0 : index
    %29 = vector.load %arg5[%c0_26, %c0_27] : memref<64x64xf32, #tpu.memory_space<vmem>>, vector<64x64xf32>
    %cst_28 = arith.constant dense<0.000000e+00> : vector<64x256xf32>
    %30 = tpu.matmul %29, %28, %cst_28 {dimension_numbers = #tpu.dot_dimension_numbers<[1], [0], [0], [1], [0, 0, 1, 1], [], []>} : vector<64x64xf32>, vector<64x256xf32>, vector<64x256xf32> -> vector<64x256xf32>
    %c0_29 = arith.constant 0 : index
    %c0_30 = arith.constant 0 : index
    %31 = vector.load %arg6[%c0_29, %c0_30] : memref<64x64xf32, #tpu.memory_space<vmem>>, vector<64x64xf32>
    %cst_31 = arith.constant dense<0.000000e+00> : vector<64x256xf32>
    %32 = tpu.matmul %31, %28, %cst_31 {dimension_numbers = #tpu.dot_dimension_numbers<[1], [0], [0], [1], [0, 0, 1, 1], [], []>} : vector<64x64xf32>, vector<64x256xf32>, vector<64x256xf32> -> vector<64x256xf32>
    %33 = tpu.concatenate %30, %28, %32 in 1 : vector<64x256xf32>, vector<64x256xf32>, vector<64x256xf32> -> vector<64x768xf32>
    %c0_32 = arith.constant 0 : index
    %c0_33 = arith.constant 0 : index
    %34 = vector.load %arg10[%c0_32, %c0_33] : memref<768x256xf32, #tpu.memory_space<vmem>>, vector<768x256xf32>
    %cst_34 = arith.constant dense<0.000000e+00> : vector<64x256xf32>
    %35 = tpu.matmul %33, %34, %cst_34 {dimension_numbers = #tpu.dot_dimension_numbers<[1], [0], [0], [1], [0, 0, 1, 1], [], []>} : vector<64x768xf32>, vector<768x256xf32>, vector<64x256xf32> -> vector<64x256xf32>
    %c0_35 = arith.constant 0 : index
    %c0_36 = arith.constant 0 : index
    %36 = vector.load %arg11[%c0_35, %c0_36] : memref<1x256xf32, #tpu.memory_space<vmem>>, vector<1x256xf32>
    %37 = vector.broadcast %36 : vector<1x256xf32> to vector<64x256xf32>
    %38 = arith.mulf %35, %37 : vector<64x256xf32>
    %c0_37 = arith.constant 0 : index
    %c0_38 = arith.constant 0 : index
    %39 = vector.load %arg12[%c0_37, %c0_38] : memref<1x256xf32, #tpu.memory_space<vmem>>, vector<1x256xf32>
    %40 = vector.broadcast %39 : vector<1x256xf32> to vector<64x256xf32>
    %41 = arith.addf %38, %40 : vector<64x256xf32>
    %cst_39 = arith.constant 0.000000e+00 : f32
    %42 = vector.broadcast %cst_39 : f32 to vector<64x256xf32>
    %43 = arith.cmpf oge, %41, %42 : vector<64x256xf32>
    %cst_40 = arith.constant 0.00999999977 : f32
    %44 = vector.broadcast %cst_40 : f32 to vector<64x256xf32>
    %45 = arith.mulf %44, %41 : vector<64x256xf32>
    %46 = arith.select %43, %41, %45 : vector<64x256xi1>, vector<64x256xf32>
    %c0_41 = arith.constant 0 : index
    %c0_42 = arith.constant 0 : index
    %47 = vector.load %arg13[%c0_41, %c0_42] : memref<64x256xf32, #tpu.memory_space<vmem>>, vector<64x256xf32>
    tpu.vector_store %arg13[%c0_41, %c0_42], %46 {strides = array<i32>} : memref<64x256xf32, #tpu.memory_space<vmem>>, vector<64x256xf32>,
    return
  }
}

</mosaic_0001>

<llo_original>
// kernel: upconv_forward.1
$region0: #{upconv_forward.1}
  #allocation0 [shape = 'u32[]', space=smem, size = 0x4, offset = 0x4, fixed_abs, tag = 'smem constant byte address 0x4 - core index']
  #allocation1 [shape = 'u32[144,128]{1,0:T(1,128)}', space=vmem, size = 0x12000, scoped, tag = 'internal scratch']
  %s0 = inlined_call_operand.vmem [shape: f32[32,64], index: 0, kind: input, shape index: {}]
  %s1 = inlined_call_operand.vmem [shape: f32[64,128], index: 1, kind: input, shape index: {}]
  %s2 = inlined_call_operand.vmem [shape: f32[64,128], index: 2, kind: input, shape index: {}]
  %s3 = inlined_call_operand.vmem [shape: f32[64,64], index: 3, kind: input, shape index: {}]
  %s4 = inlined_call_operand.vmem [shape: f32[1,128], index: 4, kind: input, shape index: {}]
  %s5 = inlined_call_operand.vmem [shape: f32[64,64], index: 5, kind: input, shape index: {}]
  %s6 = inlined_call_operand.vmem [shape: f32[64,64], index: 6, kind: input, shape index: {}]
  %s7 = inlined_call_operand.hbm [shape: f32[384,256], index: 7, kind: input, shape index: {}]
  %s8 = inlined_call_operand.vmem [shape: f32[1,256], index: 8, kind: input, shape index: {}]
  %s9 = inlined_call_operand.vmem [shape: f32[1,256], index: 9, kind: input, shape index: {}]
  %s10 = inlined_call_operand.hbm [shape: f32[768,256], index: 10, kind: input, shape index: {}]
  %s11 = inlined_call_operand.vmem [shape: f32[1,256], index: 11, kind: input, shape index: {}]
  %s12 = inlined_call_operand.vmem [shape: f32[1,256], index: 12, kind: input, shape index: {}]
  %s13 = inlined_call_operand.vmem [shape: f32[64,256], index: 13, kind: output, shape index: {}]
  %s14 = sld [smem:[#allocation0]]
  $region70: #{upconv_forward.1} parent=0
    _
  %s16 = ssub.s32 1, %s14
  %s17 = scalar_select 0, %s16, %s14
  $region1: #{upconv_forward.1} parent=0
    #allocation2 [shape = 'u8[393216]{0}', space=vmem, size = 0x60000, scoped, tag = 'input window, operand 7, single buffered']
    #allocation3 [shape = 's32[1]{0}', space=sflag, size = 0x4, scoped, tag = 'scoped memory for upconv_forward.1']
    #allocation4 [shape = 'u8[786432]{0}', space=vmem, size = 0xc0000, scoped, tag = 'input window, operand 10, single buffered']
    #allocation5 [shape = 's32[1]{0}', space=sflag, size = 0x4, scoped, tag = 'scoped memory for upconv_forward.1']
    %18 = vsyncpa [#allocation3], 0
    %19 = vsyncpa [#allocation5], 0
    // Predicated region
    $region2: #{upconv_forward.1} parent=1 // pred_check
      _
    $region3: #{upconv_forward.1} parent=1 // pred_check_branch
      %21 = sbr.rel (0) target = $region5
    $region4: #{upconv_forward.1} parent=1 // pred_region
      _
    $region5: #{upconv_forward.1} parent=1 // pred_fallthru
      _
    // Predicated region
    $region6: #{upconv_forward.1} parent=1 // pred_check
      _
    $region7: #{upconv_forward.1} parent=1 // pred_check_branch
      %23 = sbr.rel (0) target = $region9
    $region8: #{upconv_forward.1} parent=1 // pred_region
      _
    $region9: #{upconv_forward.1} parent=1 // pred_fallthru
      _
    // Predicated region
    $region10: #{upconv_forward.1} parent=1 // pred_check
      _
    $region11: #{upconv_forward.1} parent=1 // pred_check_branch
      %25 = sbr.rel (0) target = $region13
    $region12: #{upconv_forward.1} parent=1 // pred_region
      _
    $region13: #{upconv_forward.1} parent=1 // pred_fallthru
      _
    // Predicated region
    $region14: #{upconv_forward.1} parent=1 // pred_check
      _
    $region15: #{upconv_forward.1} parent=1 // pred_check_branch
      %27 = sbr.rel (0) target = $region17
    $region16: #{upconv_forward.1} parent=1 // pred_region
      _
    $region17: #{upconv_forward.1} parent=1 // pred_fallthru
      _
    // Predicated region
    $region18: #{upconv_forward.1} parent=1 // pred_check
      _
    $region19: #{upconv_forward.1} parent=1 // pred_check_branch
      %29 = sbr.rel (0) target = $region21
    $region20: #{upconv_forward.1} parent=1 // pred_region
      _
    $region21: #{upconv_forward.1} parent=1 // pred_fallthru
      _
    // Predicated region
    $region22: #{upconv_forward.1} parent=1 // pred_check
      _
    $region23: #{upconv_forward.1} parent=1 // pred_check_branch
      %31 = sbr.rel (0) target = $region25
    $region24: #{upconv_forward.1} parent=1 // pred_region
      _
    $region25: #{upconv_forward.1} parent=1 // pred_fallthru
      _
    // Predicated region
    $region26: #{upconv_forward.1} parent=1 // pred_check
      _
    $region27: #{upconv_forward.1} parent=1 // pred_check_branch
      %33 = sbr.rel (0) target = $region29
    $region28: #{upconv_forward.1} parent=1 // pred_region
      _
    $region29: #{upconv_forward.1} parent=1 // pred_fallthru
      _
    // Predicated region
    $region30: #{upconv_forward.1} parent=1 // pred_check
      _
    $region31: #{upconv_forward.1} parent=1 // pred_check_branch
      %35 = sbr.rel (0) target = $region33
    $region32: #{upconv_forward.1} parent=1 // pred_region
      %s37 = ssub.s32 12288, 12288
      %38 = vsyncadd [#allocation3], %s37
      %s39 = sshll.u32 [#allocation2], 4
      %s40 = int_to_ptr.vmem [resolvable:$true] %s39
      %45 = dma.hbm_to_vmem [thread:$0]  %s7, 12288, %s40, [#allocation3], 256, 256, 16
    $region33: #{upconv_forward.1} parent=1 // pred_fallthru
      _
    // Predicated region
    $region34: #{upconv_forward.1} parent=1 // pred_check
      _
    $region35: #{upconv_forward.1} parent=1 // pred_check_branch
      %47 = sbr.rel (0) target = $region37
    $region36: #{upconv_forward.1} parent=1 // pred_region
      _
    $region37: #{upconv_forward.1} parent=1 // pred_fallthru
      _
    // Predicated region
    $region38: #{upconv_forward.1} parent=1 // pred_check
      _
    $region39: #{upconv_forward.1} parent=1 // pred_check_branch
      %49 = sbr.rel (0) target = $region41
    $region40: #{upconv_forward.1} parent=1 // pred_region
      _
    $region41: #{upconv_forward.1} parent=1 // pred_fallthru
      _
    // Predicated region
    $region42: #{upconv_forward.1} parent=1 // pred_check
      _
    $region43: #{upconv_forward.1} parent=1 // pred_check_branch
      %51 = sbr.rel (0) target = $region45
    $region44: #{upconv_forward.1} parent=1 // pred_region
      %s53 = ssub.s32 24576, 24576
      %54 = vsyncadd [#allocation5], %s53
      %s55 = sshll.u32 [#allocation4], 4
      %s56 = int_to_ptr.vmem [resolvable:$true] %s55
      %61 = dma.hbm_to_vmem [thread:$0]  %s10, 24576, %s56, [#allocation5], 256, 256, 16
    $region45: #{upconv_forward.1} parent=1 // pred_fallthru
      _
    // Predicated region
    $region46: #{upconv_forward.1} parent=1 // pred_check
      _
    $region47: #{upconv_forward.1} parent=1 // pred_check_branch
      %63 = sbr.rel (0) target = $region49
    $region48: #{upconv_forward.1} parent=1 // pred_region
      _
    $region49: #{upconv_forward.1} parent=1 // pred_fallthru
      _
    // Predicated region
    $region50: #{upconv_forward.1} parent=1 // pred_check
      _
    $region51: #{upconv_forward.1} parent=1 // pred_check_branch
      %65 = sbr.rel (0) target = $region53
    $region52: #{upconv_forward.1} parent=1 // pred_region
      _
    $region53: #{upconv_forward.1} parent=1 // pred_fallthru
      _
    // Predicated region
    $region54: #{upconv_forward.1} parent=1 // pred_check
      _
    $region55: #{upconv_forward.1} parent=1 // pred_check_branch
      %67 = sbr.rel (0) target = $region57
    $region56: #{upconv_forward.1} parent=1 // pred_region
      %68 = dma.done [#allocation3], 12288
    $region57: #{upconv_forward.1} parent=1 // pred_fallthru
      _
    // Predicated region
    $region58: #{upconv_forward.1} parent=1 // pred_check
      _
    $region59: #{upconv_forward.1} parent=1 // pred_check_branch
      %70 = sbr.rel (0) target = $region61
    $region60: #{upconv_forward.1} parent=1 // pred_region
      %71 = dma.done [#allocation5], 24576
    $region61: #{upconv_forward.1} parent=1 // pred_fallthru
      _
    %v72 = vld [vmem:[%s0] sm:$0xff]
    %v73 = vld [vmem:[%s0 + $0x8] sm:$0xff]
    %v74 = vld [vmem:[%s0 + $0x10] sm:$0xff]
    %v75 = vld [vmem:[%s0 + $0x18] sm:$0xff]
    %v76 = vld [vmem:[%s1] sm:$0xff]
    %v77 = vld [vmem:[%s1 + $0x8] sm:$0xff]
    %v78 = vld [vmem:[%s1 + $0x10] sm:$0xff]
    %v79 = vld [vmem:[%s1 + $0x18] sm:$0xff]
    %v80 = vld [vmem:[%s1 + $0x20] sm:$0xff]
    %v81 = vld [vmem:[%s1 + $0x28] sm:$0xff]
    %v82 = vld [vmem:[%s1 + $0x30] sm:$0xff]
    %v83 = vld [vmem:[%s1 + $0x38] sm:$0xff]
    %vm84 = vcmask 523264
    %v86 = vsel %vm84, %v72, 0
    %v89 = vsel %vm84, %v73, 0
    %v92 = vsel %vm84, %v74, 0
    %v95 = vsel %vm84, %v75, 0
    %97 = vmatprep.subr.mxu0 0.0
    %98 = vmatpush1.msra.mxu0 %v76
    %99 = vmatprep.subr.mxu0 0.0
    %100 = vmatpush1.msra.mxu0 %v77
    %101 = vmatprep.subr.mxu0 0.0
    %102 = vmatpush1.msra.mxu0 %v78
    %103 = vmatprep.subr.mxu0 0.0
    %104 = vmatpush1.msra.mxu0 %v79
    %105 = vmatprep.subr.mxu0 0.0
    %106 = vmatpush1.msra.mxu0 %v80
    %107 = vmatprep.subr.mxu0 0.0
    %108 = vmatpush1.msra.mxu0 %v81
    %109 = vmatprep.subr.mxu0 0.0
    %110 = vmatpush1.msra.mxu0 %v82
    %111 = vmatprep.subr.mxu0 0.0
    %112 = vmatpush1.msra.mxu0 %v83
    %113 = vmatprep.subr.mxu0 0.0
    %114 = vmatpush1.msra.mxu0 0.0
    %115 = vmatprep.subr.mxu0 0.0
    %116 = vmatpush1.msra.mxu0 0.0
    %117 = vmatprep.subr.mxu0 0.0
    %118 = vmatpush1.msra.mxu0 0.0
    %119 = vmatprep.subr.mxu0 0.0
    %120 = vmatpush1.msra.mxu0 0.0
    %121 = vmatprep.subr.mxu0 0.0
    %122 = vmatpush1.msra.mxu0 0.0
    %123 = vmatprep.subr.mxu0 0.0
    %124 = vmatpush1.msra.mxu0 0.0
    %125 = vmatprep.subr.mxu0 0.0
    %126 = vmatpush1.msra.mxu0 0.0
    %127 = vmatprep.subr.mxu0 0.0
    %128 = vmatpush1.msra.mxu0 0.0
    %129 = vmatprep.subr.mxu0 0.0
    %130 = vmatpush1.msra.mxu0 0.0
    %131 = vmatprep.subr.mxu0 0.0
    %132 = vmatpush1.msra.mxu0 0.0
    %133 = vmatprep.subr.mxu0 0.0
    %134 = vmatpush1.msra.mxu0 0.0
    %135 = vmatprep.subr.mxu0 0.0
    %136 = vmatpush1.msra.mxu0 0.0
    %137 = vmatprep.subr.mxu0 0.0
    %138 = vmatpush1.msra.mxu0 0.0
    %139 = vmatprep.subr.mxu0 0.0
    %140 = vmatpush1.msra.mxu0 0.0
    %141 = vmatprep.subr.mxu0 0.0
    %142 = vmatpush1.msra.mxu0 0.0
    %143 = vmatprep.subr.mxu0 0.0
    %144 = vmatpush1.msra.mxu0 0.0
    %145 = vmatprep.subr.mxu0 0.0
    %146 = vmatpush1.msra.mxu0 0.0
    %147 = vmatprep.subr.mxu0 0.0
    %148 = vmatpush1.msra.mxu0 0.0
    %149 = vmatprep.subr.mxu0 0.0
    %150 = vmatpush1.msra.mxu0 0.0
    %151 = vmatprep.subr.mxu0 0.0
    %152 = vmatpush1.msra.mxu0 0.0
    %153 = vmatprep.subr.mxu0 0.0
    %154 = vmatpush1.msra.mxu0 0.0
    %155 = vmatprep.subr.mxu0 0.0
    %156 = vmatpush1.msra.mxu0 0.0
    %157 = vmatprep.subr.mxu0 0.0
    %158 = vmatpush1.msra.mxu0 0.0
    %159 = vmatprep.subr.mxu0 0.0
    %160 = vmatpush1.msra.mxu0 0.0
    %161 = vmatprep.mubr.f32.mxu0 0.0
    %162 = vmatmul.mubr.f32.gmra.mrb[0].mxu0 %v86
    %v163 = vpop.f32.mrb[0].mxu0
    %v164 = vadd.f32 0.0, %v163
    %v165 = vpop.f32.mrb[0].mxu0
    %166 = vmatprep.mubr.f32.mxu0 0.0
    %167 = vmatmul.mubr.f32.gmra.mrb[0].mxu0 %v89
    %v168 = vpop.f32.mrb[0].mxu0
    %v169 = vadd.f32 0.0, %v168
    %v170 = vpop.f32.mrb[0].mxu0
    %171 = vmatprep.mubr.f32.mxu0 0.0
    %172 = vmatmul.mubr.f32.gmra.mrb[0].mxu0 %v92
    %v173 = vpop.f32.mrb[0].mxu0
    %v174 = vadd.f32 0.0, %v173
    %v175 = vpop.f32.mrb[0].mxu0
    %176 = vmatprep.mubr.f32.mxu0 0.0
    %177 = vmatmul.mubr.f32.gmra.mrb[0].mxu0 %v95
    %v178 = vpop.f32.mrb[0].mxu0
    %v179 = vadd.f32 0.0, %v178
    %v180 = vpop.f32.mrb[0].mxu0
    %181 = vdwg.mxu0
    %v182 = vld [vmem:[%s2] sm:$0xff]
    %v183 = vld [vmem:[%s2 + $0x8] sm:$0xff]
    %v184 = vld [vmem:[%s2 + $0x10] sm:$0xff]
    %v185 = vld [vmem:[%s2 + $0x18] sm:$0xff]
    %v186 = vld [vmem:[%s2 + $0x20] sm:$0xff]
    %v187 = vld [vmem:[%s2 + $0x28] sm:$0xff]
    %v188 = vld [vmem:[%s2 + $0x30] sm:$0xff]
    %v189 = vld [vmem:[%s2 + $0x38] sm:$0xff]
    %190 = vmatprep.subr.mxu0 0.0
    %191 = vmatpush1.msra.mxu0 %v182
    %192 = vmatprep.subr.mxu0 0.0
    %193 = vmatpush1.msra.mxu0 %v183
    %194 = vmatprep.subr.mxu0 0.0
    %195 = vmatpush1.msra.mxu0 %v184
    %196 = vmatprep.subr.mxu0 0.0
    %197 = vmatpush1.msra.mxu0 %v185
    %198 = vmatprep.subr.mxu0 0.0
    %199 = vmatpush1.msra.mxu0 %v186
    %200 = vmatprep.subr.mxu0 0.0
    %201 = vmatpush1.msra.mxu0 %v187
    %202 = vmatprep.subr.mxu0 0.0
    %203 = vmatpush1.msra.mxu0 %v188
    %204 = vmatprep.subr.mxu0 0.0
    %205 = vmatpush1.msra.mxu0 %v189
    %206 = vmatprep.subr.mxu0 0.0
    %207 = vmatpush1.msra.mxu0 0.0
    %208 = vmatprep.subr.mxu0 0.0
    %209 = vmatpush1.msra.mxu0 0.0
    %210 = vmatprep.subr.mxu0 0.0
    %211 = vmatpush1.msra.mxu0 0.0
    %212 = vmatprep.subr.mxu0 0.0
    %213 = vmatpush1.msra.mxu0 0.0
    %214 = vmatprep.subr.mxu0 0.0
    %215 = vmatpush1.msra.mxu0 0.0
    %216 = vmatprep.subr.mxu0 0.0
    %217 = vmatpush1.msra.mxu0 0.0
    %218 = vmatprep.subr.mxu0 0.0
    %219 = vmatpush1.msra.mxu0 0.0
    %220 = vmatprep.subr.mxu0 0.0
    %221 = vmatpush1.msra.mxu0 0.0
    %222 = vmatprep.subr.mxu0 0.0
    %223 = vmatpush1.msra.mxu0 0.0
    %224 = vmatprep.subr.mxu0 0.0
    %225 = vmatpush1.msra.mxu0 0.0
    %226 = vmatprep.subr.mxu0 0.0
    %227 = vmatpush1.msra.mxu0 0.0
    %228 = vmatprep.subr.mxu0 0.0
    %229 = vmatpush1.msra.mxu0 0.0
    %230 = vmatprep.subr.mxu0 0.0
    %231 = vmatpush1.msra.mxu0 0.0
    %232 = vmatprep.subr.mxu0 0.0
    %233 = vmatpush1.msra.mxu0 0.0
    %234 = vmatprep.subr.mxu0 0.0
    %235 = vmatpush1.msra.mxu0 0.0
    %236 = vmatprep.subr.mxu0 0.0
    %237 = vmatpush1.msra.mxu0 0.0
    %238 = vmatprep.subr.mxu0 0.0
    %239 = vmatpush1.msra.mxu0 0.0
    %240 = vmatprep.subr.mxu0 0.0
    %241 = vmatpush1.msra.mxu0 0.0
    %242 = vmatprep.subr.mxu0 0.0
    %243 = vmatpush1.msra.mxu0 0.0
    %244 = vmatprep.subr.mxu0 0.0
    %245 = vmatpush1.msra.mxu0 0.0
    %246 = vmatprep.subr.mxu0 0.0
    %247 = vmatpush1.msra.mxu0 0.0
    %248 = vmatprep.subr.mxu0 0.0
    %249 = vmatpush1.msra.mxu0 0.0
    %250 = vmatprep.subr.mxu0 0.0
    %251 = vmatpush1.msra.mxu0 0.0
    %252 = vmatprep.subr.mxu0 0.0
    %253 = vmatpush1.msra.mxu0 0.0
    %254 = vmatprep.mubr.f32.mxu0 0.0
    %255 = vmatmul.mubr.f32.gmra.mrb[0].mxu0 %v86
    %v256 = vpop.f32.mrb[0].mxu0
    %v257 = vadd.f32 0.0, %v256
    %v258 = vpop.f32.mrb[0].mxu0
    %259 = vmatprep.mubr.f32.mxu0 0.0
    %260 = vmatmul.mubr.f32.gmra.mrb[0].mxu0 %v89
    %v261 = vpop.f32.mrb[0].mxu0
    %v262 = vadd.f32 0.0, %v261
    %v263 = vpop.f32.mrb[0].mxu0
    %264 = vmatprep.mubr.f32.mxu0 0.0
    %265 = vmatmul.mubr.f32.gmra.mrb[0].mxu0 %v92
    %v266 = vpop.f32.mrb[0].mxu0
    %v267 = vadd.f32 0.0, %v266
    %v268 = vpop.f32.mrb[0].mxu0
    %269 = vmatprep.mubr.f32.mxu0 0.0
    %270 = vmatmul.mubr.f32.gmra.mrb[0].mxu0 %v95
    %v271 = vpop.f32.mrb[0].mxu0
    %v272 = vadd.f32 0.0, %v271
    %v273 = vpop.f32.mrb[0].mxu0
    %274 = vdwg.mxu0
    %v275 = vld [vmem:[%s3] sm:$0xff]
    %v276 = vld [vmem:[%s3 + $0x8] sm:$0xff]
    %v277 = vld [vmem:[%s3 + $0x10] sm:$0xff]
    %v278 = vld [vmem:[%s3 + $0x18] sm:$0xff]
    %v279 = vld [vmem:[%s3 + $0x20] sm:$0xff]
    %v280 = vld [vmem:[%s3 + $0x28] sm:$0xff]
    %v281 = vld [vmem:[%s3 + $0x30] sm:$0xff]
    %v282 = vld [vmem:[%s3 + $0x38] sm:$0xff]
    %v283 = vld [vmem:[%s4] sm:$0x1]
    %v285 = vlaneseq
    %v286 = vshrl.u32 %v285, 7
    %v287 = vsub.s32 0, %v286
    %v288 = vrot.slane %v283, %v287
    %v291 = vsel %vm84, %v275, 0
    %v294 = vsel %vm84, %v276, 0
    %v297 = vsel %vm84, %v277, 0
    %v300 = vsel %vm84, %v278, 0
    %v303 = vsel %vm84, %v279, 0
    %v306 = vsel %vm84, %v280, 0
    %v309 = vsel %vm84, %v281, 0
    %v312 = vsel %vm84, %v282, 0
    %314 = vmatprep.subr.mxu0 0.0
    %315 = vmatpush1.msra.mxu0 %v164
    %316 = vmatprep.subr.mxu0 0.0
    %317 = vmatpush1.msra.mxu0 %v169
    %318 = vmatprep.subr.mxu0 0.0
    %319 = vmatpush1.msra.mxu0 %v174
    %320 = vmatprep.subr.mxu0 0.0
    %321 = vmatpush1.msra.mxu0 %v179
    %322 = vmatprep.subr.mxu0 0.0
    %323 = vmatpush1.msra.mxu0 %v257
    %324 = vmatprep.subr.mxu0 0.0
    %325 = vmatpush1.msra.mxu0 %v262
    %326 = vmatprep.subr.mxu0 0.0
    %327 = vmatpush1.msra.mxu0 %v267
    %328 = vmatprep.subr.mxu0 0.0
    %329 = vmatpush1.msra.mxu0 %v272
    %330 = vmatprep.subr.mxu0 0.0
    %331 = vmatpush1.msra.mxu0 0.0
    %332 = vmatprep.subr.mxu0 0.0
    %333 = vmatpush1.msra.mxu0 0.0
    %334 = vmatprep.subr.mxu0 0.0
    %335 = vmatpush1.msra.mxu0 0.0
    %336 = vmatprep.subr.mxu0 0.0
    %337 = vmatpush1.msra.mxu0 0.0
    %338 = vmatprep.subr.mxu0 0.0
    %339 = vmatpush1.msra.mxu0 0.0
    %340 = vmatprep.subr.mxu0 0.0
    %341 = vmatpush1.msra.mxu0 0.0
    %342 = vmatprep.subr.mxu0 0.0
    %343 = vmatpush1.msra.mxu0 0.0
    %344 = vmatprep.subr.mxu0 0.0
    %345 = vmatpush1.msra.mxu0 0.0
    %346 = vmatprep.subr.mxu0 0.0
    %347 = vmatpush1.msra.mxu0 0.0
    %348 = vmatprep.subr.mxu0 0.0
    %349 = vmatpush1.msra.mxu0 0.0
    %350 = vmatprep.subr.mxu0 0.0
    %351 = vmatpush1.msra.mxu0 0.0
    %352 = vmatprep.subr.mxu0 0.0
    %353 = vmatpush1.msra.mxu0 0.0
    %354 = vmatprep.subr.mxu0 0.0
    %355 = vmatpush1.msra.mxu0 0.0
    %356 = vmatprep.subr.mxu0 0.0
    %357 = vmatpush1.msra.mxu0 0.0
    %358 = vmatprep.subr.mxu0 0.0
    %359 = vmatpush1.msra.mxu0 0.0
    %360 = vmatprep.subr.mxu0 0.0
    %361 = vmatpush1.msra.mxu0 0.0
    %362 = vmatprep.subr.mxu0 0.0
    %363 = vmatpush1.msra.mxu0 0.0
    %364 = vmatprep.subr.mxu0 0.0
    %365 = vmatpush1.msra.mxu0 0.0
    %366 = vmatprep.subr.mxu0 0.0
    %367 = vmatpush1.msra.mxu0 0.0
    %368 = vmatprep.subr.mxu0 0.0
    %369 = vmatpush1.msra.mxu0 0.0
    %370 = vmatprep.subr.mxu0 0.0
    %371 = vmatpush1.msra.mxu0 0.0
    %372 = vmatprep.subr.mxu0 0.0
    %373 = vmatpush1.msra.mxu0 0.0
    %374 = vmatprep.subr.mxu0 0.0
    %375 = vmatpush1.msra.mxu0 0.0
    %376 = vmatprep.subr.mxu0 0.0
    %377 = vmatpush1.msra.mxu0 0.0
    %378 = vmatprep.mubr.f32.mxu0 0.0
    %379 = vmatmul.mubr.f32.gmra.mrb[0].mxu0 %v291
    %v380 = vpop.f32.mrb[0].mxu0
    %v381 = vadd.f32 %v288, %v380
    %v382 = vpop.f32.mrb[0].mxu0
    %383 = vmatprep.mubr.f32.mxu0 0.0
    %384 = vmatmul.mubr.f32.gmra.mrb[0].mxu0 %v294
    %v385 = vpop.f32.mrb[0].mxu0
    %v386 = vadd.f32 %v288, %v385
    %v387 = vpop.f32.mrb[0].mxu0
    %388 = vmatprep.mubr.f32.mxu0 0.0
    %389 = vmatmul.mubr.f32.gmra.mrb[0].mxu0 %v297
    %v390 = vpop.f32.mrb[0].mxu0
    %v391 = vadd.f32 %v288, %v390
    %v392 = vpop.f32.mrb[0].mxu0
    %393 = vmatprep.mubr.f32.mxu0 0.0
    %394 = vmatmul.mubr.f32.gmra.mrb[0].mxu0 %v300
    %v395 = vpop.f32.mrb[0].mxu0
    %v396 = vadd.f32 %v288, %v395
    %v397 = vpop.f32.mrb[0].mxu0
    %398 = vmatprep.mubr.f32.mxu0 0.0
    %399 = vmatmul.mubr.f32.gmra.mrb[0].mxu0 %v303
    %v400 = vpop.f32.mrb[0].mxu0
    %v401 = vadd.f32 %v288, %v400
    %v402 = vpop.f32.mrb[0].mxu0
    %403 = vmatprep.mubr.f32.mxu0 0.0
    %404 = vmatmul.mubr.f32.gmra.mrb[0].mxu0 %v306
    %v405 = vpop.f32.mrb[0].mxu0
    %v406 = vadd.f32 %v288, %v405
    %v407 = vpop.f32.mrb[0].mxu0
    %408 = vmatprep.mubr.f32.mxu0 0.0
    %409 = vmatmul.mubr.f32.gmra.mrb[0].mxu0 %v309
    %v410 = vpop.f32.mrb[0].mxu0
    %v411 = vadd.f32 %v288, %v410
    %v412 = vpop.f32.mrb[0].mxu0
    %413 = vmatprep.mubr.f32.mxu0 0.0
    %414 = vmatmul.mubr.f32.gmra.mrb[0].mxu0 %v312
    %v415 = vpop.f32.mrb[0].mxu0
    %v416 = vadd.f32 %v288, %v415
    %v417 = vpop.f32.mrb[0].mxu0
    %418 = vdwg.mxu0
    %v419 = vld [vmem:[%s5] sm:$0xff]
    %v420 = vld [vmem:[%s5 + $0x8] sm:$0xff]
    %v421 = vld [vmem:[%s5 + $0x10] sm:$0xff]
    %v422 = vld [vmem:[%s5 + $0x18] sm:$0xff]
    %v423 = vld [vmem:[%s5 + $0x20] sm:$0xff]
    %v424 = vld [vmem:[%s5 + $0x28] sm:$0xff]
    %v425 = vld [vmem:[%s5 + $0x30] sm:$0xff]
    %v426 = vld [vmem:[%s5 + $0x38] sm:$0xff]
    %v428 = vsel %vm84, %v419, 0
    %v431 = vsel %vm84, %v420, 0
    %v434 = vsel %vm84, %v421, 0
    %v437 = vsel %vm84, %v422, 0
    %v440 = vsel %vm84, %v423, 0
    %v443 = vsel %vm84, %v424, 0
    %v446 = vsel %vm84, %v425, 0
    %v449 = vsel %vm84, %v426, 0
    %451 = vmatprep.subr.mxu0 0.0
    %452 = vmatpush1.msra.mxu0 %v381
    %453 = vmatprep.subr.mxu0 0.0
    %454 = vmatpush1.msra.mxu0 %v386
    %455 = vmatprep.subr.mxu0 0.0
    %456 = vmatpush1.msra.mxu0 %v391
    %457 = vmatprep.subr.mxu0 0.0
    %458 = vmatpush1.msra.mxu0 %v396
    %459 = vmatprep.subr.mxu0 0.0
    %460 = vmatpush1.msra.mxu0 %v401
    %461 = vmatprep.subr.mxu0 0.0
    %462 = vmatpush1.msra.mxu0 %v406
    %463 = vmatprep.subr.mxu0 0.0
    %464 = vmatpush1.msra.mxu0 %v411
    %465 = vmatprep.subr.mxu0 0.0
    %466 = vmatpush1.msra.mxu0 %v416
    %467 = vmatprep.subr.mxu0 0.0
    %468 = vmatpush1.msra.mxu0 0.0
    %469 = vmatprep.subr.mxu0 0.0
    %470 = vmatpush1.msra.mxu0 0.0
    %471 = vmatprep.subr.mxu0 0.0
    %472 = vmatpush1.msra.mxu0 0.0
    %473 = vmatprep.subr.mxu0 0.0
    %474 = vmatpush1.msra.mxu0 0.0
    %475 = vmatprep.subr.mxu0 0.0
    %476 = vmatpush1.msra.mxu0 0.0
    %477 = vmatprep.subr.mxu0 0.0
    %478 = vmatpush1.msra.mxu0 0.0
    %479 = vmatprep.subr.mxu0 0.0
    %480 = vmatpush1.msra.mxu0 0.0
    %481 = vmatprep.subr.mxu0 0.0
    %482 = vmatpush1.msra.mxu0 0.0
    %483 = vmatprep.subr.mxu0 0.0
    %484 = vmatpush1.msra.mxu0 0.0
    %485 = vmatprep.subr.mxu0 0.0
    %486 = vmatpush1.msra.mxu0 0.0
    %487 = vmatprep.subr.mxu0 0.0
    %488 = vmatpush1.msra.mxu0 0.0
    %489 = vmatprep.subr.mxu0 0.0
    %490 = vmatpush1.msra.mxu0 0.0
    %491 = vmatprep.subr.mxu0 0.0
    %492 = vmatpush1.msra.mxu0 0.0
    %493 = vmatprep.subr.mxu0 0.0
    %494 = vmatpush1.msra.mxu0 0.0
    %495 = vmatprep.subr.mxu0 0.0
    %496 = vmatpush1.msra.mxu0 0.0
    %497 = vmatprep.subr.mxu0 0.0
    %498 = vmatpush1.msra.mxu0 0.0
    %499 = vmatprep.subr.mxu0 0.0
    %500 = vmatpush1.msra.mxu0 0.0
    %501 = vmatprep.subr.mxu0 0.0
    %502 = vmatpush1.msra.mxu0 0.0
    %503 = vmatprep.subr.mxu0 0.0
    %504 = vmatpush1.msra.mxu0 0.0
    %505 = vmatprep.subr.mxu0 0.0
    %506 = vmatpush1.msra.mxu0 0.0
    %507 = vmatprep.subr.mxu0 0.0
    %508 = vmatpush1.msra.mxu0 0.0
    %509 = vmatprep.subr.mxu0 0.0
    %510 = vmatpush1.msra.mxu0 0.0
    %511 = vmatprep.subr.mxu0 0.0
    %512 = vmatpush1.msra.mxu0 0.0
    %513 = vmatprep.subr.mxu0 0.0
    %514 = vmatpush1.msra.mxu0 0.0
    %515 = vmatprep.mubr.f32.mxu0 0.0
    %516 = vmatmul.mubr.f32.gmra.mrb[0].mxu0 %v428
    %v517 = vpop.f32.mrb[0].mxu0
    %v518 = vadd.f32 0.0, %v517
    %v519 = vpop.f32.mrb[0].mxu0
    %520 = vmatprep.mubr.f32.mxu0 0.0
    %521 = vmatmul.mubr.f32.gmra.mrb[0].mxu0 %v431
    %v522 = vpop.f32.mrb[0].mxu0
    %v523 = vadd.f32 0.0, %v522
    %v524 = vpop.f32.mrb[0].mxu0
    %525 = vmatprep.mubr.f32.mxu0 0.0
    %526 = vmatmul.mubr.f32.gmra.mrb[0].mxu0 %v434
    %v527 = vpop.f32.mrb[0].mxu0
    %v528 = vadd.f32 0.0, %v527
    %v529 = vpop.f32.mrb[0].mxu0
    %530 = vmatprep.mubr.f32.mxu0 0.0
    %531 = vmatmul.mubr.f32.gmra.mrb[0].mxu0 %v437
    %v532 = vpop.f32.mrb[0].mxu0
    %v533 = vadd.f32 0.0, %v532
    %v534 = vpop.f32.mrb[0].mxu0
    %535 = vmatprep.mubr.f32.mxu0 0.0
    %536 = vmatmul.mubr.f32.gmra.mrb[0].mxu0 %v440
    %v537 = vpop.f32.mrb[0].mxu0
    %v538 = vadd.f32 0.0, %v537
    %v539 = vpop.f32.mrb[0].mxu0
    %540 = vmatprep.mubr.f32.mxu0 0.0
    %541 = vmatmul.mubr.f32.gmra.mrb[0].mxu0 %v443
    %v542 = vpop.f32.mrb[0].mxu0
    %v543 = vadd.f32 0.0, %v542
    %v544 = vpop.f32.mrb[0].mxu0
    %545 = vmatprep.mubr.f32.mxu0 0.0
    %546 = vmatmul.mubr.f32.gmra.mrb[0].mxu0 %v446
    %v547 = vpop.f32.mrb[0].mxu0
    %v548 = vadd.f32 0.0, %v547
    %v549 = vpop.f32.mrb[0].mxu0
    %550 = vmatprep.mubr.f32.mxu0 0.0
    %551 = vmatmul.mubr.f32.gmra.mrb[0].mxu0 %v449
    %v552 = vpop.f32.mrb[0].mxu0
    %v553 = vadd.f32 0.0, %v552
    %v554 = vpop.f32.mrb[0].mxu0
    %555 = vdwg.mxu0
    %v556 = vld [vmem:[%s6] sm:$0xff]
    %v557 = vld [vmem:[%s6 + $0x8] sm:$0xff]
    %v558 = vld [vmem:[%s6 + $0x10] sm:$0xff]
    %v559 = vld [vmem:[%s6 + $0x18] sm:$0xff]
    %v560 = vld [vmem:[%s6 + $0x20] sm:$0xff]
    %v561 = vld [vmem:[%s6 + $0x28] sm:$0xff]
    %v562 = vld [vmem:[%s6 + $0x30] sm:$0xff]
    %v563 = vld [vmem:[%s6 + $0x38] sm:$0xff]
    %v565 = vsel %vm84, %v556, 0
    %v568 = vsel %vm84, %v557, 0
    %v571 = vsel %vm84, %v558, 0
    %v574 = vsel %vm84, %v559, 0
    %v577 = vsel %vm84, %v560, 0
    %v580 = vsel %vm84, %v561, 0
    %v583 = vsel %vm84, %v562, 0
    %v586 = vsel %vm84, %v563, 0
    %588 = vmatprep.subr.mxu0 0.0
    %589 = vmatpush1.msra.mxu0 %v381
    %590 = vmatprep.subr.mxu0 0.0
    %591 = vmatpush1.msra.mxu0 %v386
    %592 = vmatprep.subr.mxu0 0.0
    %593 = vmatpush1.msra.mxu0 %v391
    %594 = vmatprep.subr.mxu0 0.0
    %595 = vmatpush1.msra.mxu0 %v396
    %596 = vmatprep.subr.mxu0 0.0
    %597 = vmatpush1.msra.mxu0 %v401
    %598 = vmatprep.subr.mxu0 0.0
    %599 = vmatpush1.msra.mxu0 %v406
    %600 = vmatprep.subr.mxu0 0.0
    %601 = vmatpush1.msra.mxu0 %v411
    %602 = vmatprep.subr.mxu0 0.0
    %603 = vmatpush1.msra.mxu0 %v416
    %604 = vmatprep.subr.mxu0 0.0
    %605 = vmatpush1.msra.mxu0 0.0
    %606 = vmatprep.subr.mxu0 0.0
    %607 = vmatpush1.msra.mxu0 0.0
    %608 = vmatprep.subr.mxu0 0.0
    %609 = vmatpush1.msra.mxu0 0.0
    %610 = vmatprep.subr.mxu0 0.0
    %611 = vmatpush1.msra.mxu0 0.0
    %612 = vmatprep.subr.mxu0 0.0
    %613 = vmatpush1.msra.mxu0 0.0
    %614 = vmatprep.subr.mxu0 0.0
    %615 = vmatpush1.msra.mxu0 0.0
    %616 = vmatprep.subr.mxu0 0.0
    %617 = vmatpush1.msra.mxu0 0.0
    %618 = vmatprep.subr.mxu0 0.0
    %619 = vmatpush1.msra.mxu0 0.0
    %620 = vmatprep.subr.mxu0 0.0
    %621 = vmatpush1.msra.mxu0 0.0
    %622 = vmatprep.subr.mxu0 0.0
    %623 = vmatpush1.msra.mxu0 0.0
    %624 = vmatprep.subr.mxu0 0.0
    %625 = vmatpush1.msra.mxu0 0.0
    %626 = vmatprep.subr.mxu0 0.0
    %627 = vmatpush1.msra.mxu0 0.0
    %628 = vmatprep.subr.mxu0 0.0
    %629 = vmatpush1.msra.mxu0 0.0
    %630 = vmatprep.subr.mxu0 0.0
    %631 = vmatpush1.msra.mxu0 0.0
    %632 = vmatprep.subr.mxu0 0.0
    %633 = vmatpush1.msra.mxu0 0.0
    %634 = vmatprep.subr.mxu0 0.0
    %635 = vmatpush1.msra.mxu0 0.0
    %636 = vmatprep.subr.mxu0 0.0
    %637 = vmatpush1.msra.mxu0 0.0
    %638 = vmatprep.subr.mxu0 0.0
    %639 = vmatpush1.msra.mxu0 0.0
    %640 = vmatprep.subr.mxu0 0.0
    %641 = vmatpush1.msra.mxu0 0.0
    %642 = vmatprep.subr.mxu0 0.0
    %643 = vmatpush1.msra.mxu0 0.0
    %644 = vmatprep.subr.mxu0 0.0
    %645 = vmatpush1.msra.mxu0 0.0
    %646 = vmatprep.subr.mxu0 0.0
    %647 = vmatpush1.msra.mxu0 0.0
    %648 = vmatprep.subr.mxu0 0.0
    %649 = vmatpush1.msra.mxu0 0.0
    %650 = vmatprep.subr.mxu0 0.0
    %651 = vmatpush1.msra.mxu0 0.0
    %652 = vmatprep.mubr.f32.mxu0 0.0
    %653 = vmatmul.mubr.f32.gmra.mrb[0].mxu0 %v565
    %v654 = vpop.f32.mrb[0].mxu0
    %v655 = vadd.f32 0.0, %v654
    %v656 = vpop.f32.mrb[0].mxu0
    %657 = vmatprep.mubr.f32.mxu0 0.0
    %658 = vmatmul.mubr.f32.gmra.mrb[0].mxu0 %v568
    %v659 = vpop.f32.mrb[0].mxu0
    %v660 = vadd.f32 0.0, %v659
    %v661 = vpop.f32.mrb[0].mxu0
    %662 = vmatprep.mubr.f32.mxu0 0.0
    %663 = vmatmul.mubr.f32.gmra.mrb[0].mxu0 %v571
    %v664 = vpop.f32.mrb[0].mxu0
    %v665 = vadd.f32 0.0, %v664
    %v666 = vpop.f32.mrb[0].mxu0
    %667 = vmatprep.mubr.f32.mxu0 0.0
    %668 = vmatmul.mubr.f32.gmra.mrb[0].mxu0 %v574
    %v669 = vpop.f32.mrb[0].mxu0
    %v670 = vadd.f32 0.0, %v669
    %v671 = vpop.f32.mrb[0].mxu0
    %672 = vmatprep.mubr.f32.mxu0 0.0
    %673 = vmatmul.mubr.f32.gmra.mrb[0].mxu0 %v577
    %v674 = vpop.f32.mrb[0].mxu0
    %v675 = vadd.f32 0.0, %v674
    %v676 = vpop.f32.mrb[0].mxu0
    %677 = vmatprep.mubr.f32.mxu0 0.0
    %678 = vmatmul.mubr.f32.gmra.mrb[0].mxu0 %v580
    %v679 = vpop.f32.mrb[0].mxu0
    %v680 = vadd.f32 0.0, %v679
    %v681 = vpop.f32.mrb[0].mxu0
    %682 = vmatprep.mubr.f32.mxu0 0.0
    %683 = vmatmul.mubr.f32.gmra.mrb[0].mxu0 %v583
    %v684 = vpop.f32.mrb[0].mxu0
    %v685 = vadd.f32 0.0, %v684
    %v686 = vpop.f32.mrb[0].mxu0
    %687 = vmatprep.mubr.f32.mxu0 0.0
    %688 = vmatmul.mubr.f32.gmra.mrb[0].mxu0 %v586
    %v689 = vpop.f32.mrb[0].mxu0
    %v690 = vadd.f32 0.0, %v689
    %v691 = vpop.f32.mrb[0].mxu0
    %692 = vdwg.mxu0
    %v693 = vld [vmem:[#allocation2] sm:$0xff]
    %v694 = vld [vmem:[#allocation2 + $0x8] sm:$0xff]
    %v695 = vld [vmem:[#allocation2 + $0x10] sm:$0xff]
    %v696 = vld [vmem:[#allocation2 + $0x18] sm:$0xff]
    %v697 = vld [vmem:[#allocation2 + $0x20] sm:$0xff]
    %v698 = vld [vmem:[#allocation2 + $0x28] sm:$0xff]
    %v699 = vld [vmem:[#allocation2 + $0x30] sm:$0xff]
    %v700 = vld [vmem:[#allocation2 + $0x38] sm:$0xff]
    %v701 = vld [vmem:[#allocation2 + $0x40] sm:$0xff]
    %v702 = vld [vmem:[#allocation2 + $0x48] sm:$0xff]
    %v703 = vld [vmem:[#allocation2 + $0x50] sm:$0xff]
    %v704 = vld [vmem:[#allocation2 + $0x58] sm:$0xff]
    %v705 = vld [vmem:[#allocation2 + $0x60] sm:$0xff]
    %v706 = vld [vmem:[#allocation2 + $0x68] sm:$0xff]
    %v707 = vld [vmem:[#allocation2 + $0x70] sm:$0xff]
    %v708 = vld [vmem:[#allocation2 + $0x78] sm:$0xff]
    %v709 = vld [vmem:[#allocation2 + $0x80] sm:$0xff]
    %v710 = vld [vmem:[#allocation2 + $0x88] sm:$0xff]
    %v711 = vld [vmem:[#allocation2 + $0x90] sm:$0xff]
    %v712 = vld [vmem:[#allocation2 + $0x98] sm:$0xff]
    %v713 = vld [vmem:[#allocation2 + $0xa0] sm:$0xff]
    %v714 = vld [vmem:[#allocation2 + $0xa8] sm:$0xff]
    %v715 = vld [vmem:[#allocation2 + $0xb0] sm:$0xff]
    %v716 = vld [vmem:[#allocation2 + $0xb8] sm:$0xff]
    %v717 = vld [vmem:[#allocation2 + $0xc0] sm:$0xff]
    %v718 = vld [vmem:[#allocation2 + $0xc8] sm:$0xff]
    %v719 = vld [vmem:[#allocation2 + $0xd0] sm:$0xff]
    %v720 = vld [vmem:[#allocation2 + $0xd8] sm:$0xff]
    %v721 = vld [vmem:[#allocation2 + $0xe0] sm:$0xff]
    %v722 = vld [vmem:[#allocation2 + $0xe8] sm:$0xff]
    %v723 = vld [vmem:[#allocation2 + $0xf0] sm:$0xff]
    %v724 = vld [vmem:[#allocation2 + $0xf8] sm:$0xff]
    %v725 = vld [vmem:[#allocation2 + $0x100] sm:$0xff]
    %v726 = vld [vmem:[#allocation2 + $0x108] sm:$0xff]
    %v727 = vld [vmem:[#allocation2 + $0x110] sm:$0xff]
    %v728 = vld [vmem:[#allocation2 + $0x118] sm:$0xff]
    %v729 = vld [vmem:[#allocation2 + $0x120] sm:$0xff]
    %v730 = vld [vmem:[#allocation2 + $0x128] sm:$0xff]
    %v731 = vld [vmem:[#allocation2 + $0x130] sm:$0xff]
    %v732 = vld [vmem:[#allocation2 + $0x138] sm:$0xff]
    %v733 = vld [vmem:[#allocation2 + $0x140] sm:$0xff]
    %v734 = vld [vmem:[#allocation2 + $0x148] sm:$0xff]
    %v735 = vld [vmem:[#allocation2 + $0x150] sm:$0xff]
    %v736 = vld [vmem:[#allocation2 + $0x158] sm:$0xff]
    %v737 = vld [vmem:[#allocation2 + $0x160] sm:$0xff]
    %v738 = vld [vmem:[#allocation2 + $0x168] sm:$0xff]
    %v739 = vld [vmem:[#allocation2 + $0x170] sm:$0xff]
    %v740 = vld [vmem:[#allocation2 + $0x178] sm:$0xff]
    %v741 = vld [vmem:[#allocation2 + $0x180] sm:$0xff]
    %v742 = vld [vmem:[#allocation2 + $0x188] sm:$0xff]
    %v743 = vld [vmem:[#allocation2 + $0x190] sm:$0xff]
    %v744 = vld [vmem:[#allocation2 + $0x198] sm:$0xff]
    %v745 = vld [vmem:[#allocation2 + $0x1a0] sm:$0xff]
    %v746 = vld [vmem:[#allocation2 + $0x1a8] sm:$0xff]
    %v747 = vld [vmem:[#allocation2 + $0x1b0] sm:$0xff]
    %v748 = vld [vmem:[#allocation2 + $0x1b8] sm:$0xff]
    %v749 = vld [vmem:[#allocation2 + $0x1c0] sm:$0xff]
    %v750 = vld [vmem:[#allocation2 + $0x1c8] sm:$0xff]
    %v751 = vld [vmem:[#allocation2 + $0x1d0] sm:$0xff]
    %v752 = vld [vmem:[#allocation2 + $0x1d8] sm:$0xff]
    %v753 = vld [vmem:[#allocation2 + $0x1e0] sm:$0xff]
    %v754 = vld [vmem:[#allocation2 + $0x1e8] sm:$0xff]
    %v755 = vld [vmem:[#allocation2 + $0x1f0] sm:$0xff]
    %v756 = vld [vmem:[#allocation2 + $0x1f8] sm:$0xff]
    %v757 = vld [vmem:[#allocation2 + $0x200] sm:$0xff]
    %v758 = vld [vmem:[#allocation2 + $0x208] sm:$0xff]
    %v759 = vld [vmem:[#allocation2 + $0x210] sm:$0xff]
    %v760 = vld [vmem:[#allocation2 + $0x218] sm:$0xff]
    %v761 = vld [vmem:[#allocation2 + $0x220] sm:$0xff]
    %v762 = vld [vmem:[#allocation2 + $0x228] sm:$0xff]
    %v763 = vld [vmem:[#allocation2 + $0x230] sm:$0xff]
    %v764 = vld [vmem:[#allocation2 + $0x238] sm:$0xff]
    %v765 = vld [vmem:[#allocation2 + $0x240] sm:$0xff]
    %v766 = vld [vmem:[#allocation2 + $0x248] sm:$0xff]
    %v767 = vld [vmem:[#allocation2 + $0x250] sm:$0xff]
    %v768 = vld [vmem:[#allocation2 + $0x258] sm:$0xff]
    %v769 = vld [vmem:[#allocation2 + $0x260] sm:$0xff]
    %v770 = vld [vmem:[#allocation2 + $0x268] sm:$0xff]
    %v771 = vld [vmem:[#allocation2 + $0x270] sm:$0xff]
    %v772 = vld [vmem:[#allocation2 + $0x278] sm:$0xff]
    %v773 = vld [vmem:[#allocation2 + $0x280] sm:$0xff]
    %v774 = vld [vmem:[#allocation2 + $0x288] sm:$0xff]
    %v775 = vld [vmem:[#allocation2 + $0x290] sm:$0xff]
    %v776 = vld [vmem:[#allocation2 + $0x298] sm:$0xff]
    %v777 = vld [vmem:[#allocation2 + $0x2a0] sm:$0xff]
    %v778 = vld [vmem:[#allocation2 + $0x2a8] sm:$0xff]
    %v779 = vld [vmem:[#allocation2 + $0x2b0] sm:$0xff]
    %v780 = vld [vmem:[#allocation2 + $0x2b8] sm:$0xff]
    %v781 = vld [vmem:[#allocation2 + $0x2c0] sm:$0xff]
    %v782 = vld [vmem:[#allocation2 + $0x2c8] sm:$0xff]
    %v783 = vld [vmem:[#allocation2 + $0x2d0] sm:$0xff]
    %v784 = vld [vmem:[#allocation2 + $0x2d8] sm:$0xff]
    %v785 = vld [vmem:[#allocation2 + $0x2e0] sm:$0xff]
    %v786 = vld [vmem:[#allocation2 + $0x2e8] sm:$0xff]
    %v787 = vld [vmem:[#allocation2 + $0x2f0] sm:$0xff]
    %v788 = vld [vmem:[#allocation2 + $0x2f8] sm:$0xff]
    %789 = vmatprep.subr.mxu0 %v694
    %790 = vmatpush1.msra.mxu0 %v693
    %791 = vmatprep.subr.mxu0 %v696
    %792 = vmatpush1.msra.mxu0 %v695
    %793 = vmatprep.subr.mxu0 %v698
    %794 = vmatpush1.msra.mxu0 %v697
    %795 = vmatprep.subr.mxu0 %v700
    %796 = vmatpush1.msra.mxu0 %v699
    %797 = vmatprep.subr.mxu0 %v702
    %798 = vmatpush1.msra.mxu0 %v701
    %799 = vmatprep.subr.mxu0 %v704
    %800 = vmatpush1.msra.mxu0 %v703
    %801 = vmatprep.subr.mxu0 %v706
    %802 = vmatpush1.msra.mxu0 %v705
    %803 = vmatprep.subr.mxu0 %v708
    %804 = vmatpush1.msra.mxu0 %v707
    %805 = vmatprep.subr.mxu0 %v710
    %806 = vmatpush1.msra.mxu0 %v709
    %807 = vmatprep.subr.mxu0 %v712
    %808 = vmatpush1.msra.mxu0 %v711
    %809 = vmatprep.subr.mxu0 %v714
    %810 = vmatpush1.msra.mxu0 %v713
    %811 = vmatprep.subr.mxu0 %v716
    %812 = vmatpush1.msra.mxu0 %v715
    %813 = vmatprep.subr.mxu0 %v718
    %814 = vmatpush1.msra.mxu0 %v717
    %815 = vmatprep.subr.mxu0 %v720
    %816 = vmatpush1.msra.mxu0 %v719
    %817 = vmatprep.subr.mxu0 %v722
    %818 = vmatpush1.msra.mxu0 %v721
    %819 = vmatprep.subr.mxu0 %v724
    %820 = vmatpush1.msra.mxu0 %v723
    %821 = vmatprep.subr.mxu0 %v726
    %822 = vmatpush1.msra.mxu0 %v725
    %823 = vmatprep.subr.mxu0 %v728
    %824 = vmatpush1.msra.mxu0 %v727
    %825 = vmatprep.subr.mxu0 %v730
    %826 = vmatpush1.msra.mxu0 %v729
    %827 = vmatprep.subr.mxu0 %v732
    %828 = vmatpush1.msra.mxu0 %v731
    %829 = vmatprep.subr.mxu0 %v734
    %830 = vmatpush1.msra.mxu0 %v733
    %831 = vmatprep.subr.mxu0 %v736
    %832 = vmatpush1.msra.mxu0 %v735
    %833 = vmatprep.subr.mxu0 %v738
    %834 = vmatpush1.msra.mxu0 %v737
    %835 = vmatprep.subr.mxu0 %v740
    %836 = vmatpush1.msra.mxu0 %v739
    %837 = vmatprep.subr.mxu0 %v742
    %838 = vmatpush1.msra.mxu0 %v741
    %839 = vmatprep.subr.mxu0 %v744
    %840 = vmatpush1.msra.mxu0 %v743
    %841 = vmatprep.subr.mxu0 %v746
    %842 = vmatpush1.msra.mxu0 %v745
    %843 = vmatprep.subr.mxu0 %v748
    %844 = vmatpush1.msra.mxu0 %v747
    %845 = vmatprep.subr.mxu0 %v750
    %846 = vmatpush1.msra.mxu0 %v749
    %847 = vmatprep.subr.mxu0 %v752
    %848 = vmatpush1.msra.mxu0 %v751
    %849 = vmatprep.subr.mxu0 %v754
    %850 = vmatpush1.msra.mxu0 %v753
    %851 = vmatprep.subr.mxu0 %v756
    %852 = vmatpush1.msra.mxu0 %v755
    %853 = vmatprep.mubr.f32.mxu0 %v381
    %854 = vmatmul.mubr.f32.gmra.mrb[0].mxu0 %v518
    %v855 = vpop.f32.mrb[0].mxu0
    %v856 = vadd.f32 0.0, %v855
    %v857 = vpop.f32.mrb[0].mxu0
    %v858 = vadd.f32 0.0, %v857
    %859 = vmatprep.mubr.f32.mxu0 %v386
    %860 = vmatmul.mubr.f32.gmra.mrb[0].mxu0 %v523
    %v861 = vpop.f32.mrb[0].mxu0
    %v862 = vadd.f32 0.0, %v861
    %v863 = vpop.f32.mrb[0].mxu0
    %v864 = vadd.f32 0.0, %v863
    %865 = vmatprep.mubr.f32.mxu0 %v391
    %866 = vmatmul.mubr.f32.gmra.mrb[0].mxu0 %v528
    %v867 = vpop.f32.mrb[0].mxu0
    %v868 = vadd.f32 0.0, %v867
    %v869 = vpop.f32.mrb[0].mxu0
    %v870 = vadd.f32 0.0, %v869
    %871 = vmatprep.mubr.f32.mxu0 %v396
    %872 = vmatmul.mubr.f32.gmra.mrb[0].mxu0 %v533
    %v873 = vpop.f32.mrb[0].mxu0
    %v874 = vadd.f32 0.0, %v873
    %v875 = vpop.f32.mrb[0].mxu0
    %v876 = vadd.f32 0.0, %v875
    %877 = vmatprep.mubr.f32.mxu0 %v401
    %878 = vmatmul.mubr.f32.gmra.mrb[0].mxu0 %v538
    %v879 = vpop.f32.mrb[0].mxu0
    %v880 = vadd.f32 0.0, %v879
    %v881 = vpop.f32.mrb[0].mxu0
    %v882 = vadd.f32 0.0, %v881
    %883 = vmatprep.mubr.f32.mxu0 %v406
    %884 = vmatmul.mubr.f32.gmra.mrb[0].mxu0 %v543
    %v885 = vpop.f32.mrb[0].mxu0
    %v886 = vadd.f32 0.0, %v885
    %v887 = vpop.f32.mrb[0].mxu0
    %v888 = vadd.f32 0.0, %v887
    %889 = vmatprep.mubr.f32.mxu0 %v411
    %890 = vmatmul.mubr.f32.gmra.mrb[0].mxu0 %v548
    %v891 = vpop.f32.mrb[0].mxu0
    %v892 = vadd.f32 0.0, %v891
    %v893 = vpop.f32.mrb[0].mxu0
    %v894 = vadd.f32 0.0, %v893
    %895 = vmatprep.mubr.f32.mxu0 %v416
    %896 = vmatmul.mubr.f32.gmra.mrb[0].mxu0 %v553
    %v897 = vpop.f32.mrb[0].mxu0
    %v898 = vadd.f32 0.0, %v897
    %v899 = vpop.f32.mrb[0].mxu0
    %v900 = vadd.f32 0.0, %v899
    %901 = vdwg.mxu0
    %902 = vmatprep.subr.mxu0 %v758
    %903 = vmatpush1.msra.mxu0 %v757
    %904 = vmatprep.subr.mxu0 %v760
    %905 = vmatpush1.msra.mxu0 %v759
    %906 = vmatprep.subr.mxu0 %v762
    %907 = vmatpush1.msra.mxu0 %v761
    %908 = vmatprep.subr.mxu0 %v764
    %909 = vmatpush1.msra.mxu0 %v763
    %910 = vmatprep.subr.mxu0 %v766
    %911 = vmatpush1.msra.mxu0 %v765
    %912 = vmatprep.subr.mxu0 %v768
    %913 = vmatpush1.msra.mxu0 %v767
    %914 = vmatprep.subr.mxu0 %v770
    %915 = vmatpush1.msra.mxu0 %v769
    %916 = vmatprep.subr.mxu0 %v772
    %917 = vmatpush1.msra.mxu0 %v771
    %918 = vmatprep.subr.mxu0 %v774
    %919 = vmatpush1.msra.mxu0 %v773
    %920 = vmatprep.subr.mxu0 %v776
    %921 = vmatpush1.msra.mxu0 %v775
    %922 = vmatprep.subr.mxu0 %v778
    %923 = vmatpush1.msra.mxu0 %v777
    %924 = vmatprep.subr.mxu0 %v780
    %925 = vmatpush1.msra.mxu0 %v779
    %926 = vmatprep.subr.mxu0 %v782
    %927 = vmatpush1.msra.mxu0 %v781
    %928 = vmatprep.subr.mxu0 %v784
    %929 = vmatpush1.msra.mxu0 %v783
    %930 = vmatprep.subr.mxu0 %v786
    %931 = vmatpush1.msra.mxu0 %v785
    %932 = vmatprep.subr.mxu0 %v788
    %933 = vmatpush1.msra.mxu0 %v787
    %934 = vmatprep.subr.mxu0 0.0
    %935 = vmatpush1.msra.mxu0 0.0
    %936 = vmatprep.subr.mxu0 0.0
    %937 = vmatpush1.msra.mxu0 0.0
    %938 = vmatprep.subr.mxu0 0.0
    %939 = vmatpush1.msra.mxu0 0.0
    %940 = vmatprep.subr.mxu0 0.0
    %941 = vmatpush1.msra.mxu0 0.0
    %942 = vmatprep.subr.mxu0 0.0
    %943 = vmatpush1.msra.mxu0 0.0
    %944 = vmatprep.subr.mxu0 0.0
    %945 = vmatpush1.msra.mxu0 0.0
    %946 = vmatprep.subr.mxu0 0.0
    %947 = vmatpush1.msra.mxu0 0.0
    %948 = vmatprep.subr.mxu0 0.0
    %949 = vmatpush1.msra.mxu0 0.0
    %950 = vmatprep.subr.mxu0 0.0
    %951 = vmatpush1.msra.mxu0 0.0
    %952 = vmatprep.subr.mxu0 0.0
    %953 = vmatpush1.msra.mxu0 0.0
    %954 = vmatprep.subr.mxu0 0.0
    %955 = vmatpush1.msra.mxu0 0.0
    %956 = vmatprep.subr.mxu0 0.0
    %957 = vmatpush1.msra.mxu0 0.0
    %958 = vmatprep.subr.mxu0 0.0
    %959 = vmatpush1.msra.mxu0 0.0
    %960 = vmatprep.subr.mxu0 0.0
    %961 = vmatpush1.msra.mxu0 0.0
    %962 = vmatprep.subr.mxu0 0.0
    %963 = vmatpush1.msra.mxu0 0.0
    %964 = vmatprep.subr.mxu0 0.0
    %965 = vmatpush1.msra.mxu0 0.0
    %966 = vmatprep.mubr.f32.mxu0 0.0
    %967 = vmatmul.mubr.f32.gmra.mrb[0].mxu0 %v655
    %v968 = vpop.f32.mrb[0].mxu0
    %v969 = vadd.f32 %v856, %v968
    %v970 = vpop.f32.mrb[0].mxu0
    %v971 = vadd.f32 %v858, %v970
    %972 = vmatprep.mubr.f32.mxu0 0.0
    %973 = vmatmul.mubr.f32.gmra.mrb[0].mxu0 %v660
    %v974 = vpop.f32.mrb[0].mxu0
    %v975 = vadd.f32 %v862, %v974
    %v976 = vpop.f32.mrb[0].mxu0
    %v977 = vadd.f32 %v864, %v976
    %978 = vmatprep.mubr.f32.mxu0 0.0
    %979 = vmatmul.mubr.f32.gmra.mrb[0].mxu0 %v665
    %v980 = vpop.f32.mrb[0].mxu0
    %v981 = vadd.f32 %v868, %v980
    %v982 = vpop.f32.mrb[0].mxu0
    %v983 = vadd.f32 %v870, %v982
    %984 = vmatprep.mubr.f32.mxu0 0.0
    %985 = vmatmul.mubr.f32.gmra.mrb[0].mxu0 %v670
    %v986 = vpop.f32.mrb[0].mxu0
    %v987 = vadd.f32 %v874, %v986
    %v988 = vpop.f32.mrb[0].mxu0
    %v989 = vadd.f32 %v876, %v988
    %990 = vmatprep.mubr.f32.mxu0 0.0
    %991 = vmatmul.mubr.f32.gmra.mrb[0].mxu0 %v675
    %v992 = vpop.f32.mrb[0].mxu0
    %v993 = vadd.f32 %v880, %v992
    %v994 = vpop.f32.mrb[0].mxu0
    %v995 = vadd.f32 %v882, %v994
    %996 = vmatprep.mubr.f32.mxu0 0.0
    %997 = vmatmul.mubr.f32.gmra.mrb[0].mxu0 %v680
    %v998 = vpop.f32.mrb[0].mxu0
    %v999 = vadd.f32 %v886, %v998
    %v1000 = vpop.f32.mrb[0].mxu0
    %v1001 = vadd.f32 %v888, %v1000
    %1002 = vmatprep.mubr.f32.mxu0 0.0
    %1003 = vmatmul.mubr.f32.gmra.mrb[0].mxu0 %v685
    %v1004 = vpop.f32.mrb[0].mxu0
    %v1005 = vadd.f32 %v892, %v1004
    %v1006 = vpop.f32.mrb[0].mxu0
    %v1007 = vadd.f32 %v894, %v1006
    %1008 = vmatprep.mubr.f32.mxu0 0.0
    %1009 = vmatmul.mubr.f32.gmra.mrb[0].mxu0 %v690
    %v1010 = vpop.f32.mrb[0].mxu0
    %v1011 = vadd.f32 %v898, %v1010
    %v1012 = vpop.f32.mrb[0].mxu0
    %v1013 = vadd.f32 %v900, %v1012
    %1014 = vdwg.mxu0
    %v1015 = vld [vmem:[%s8] sm:$0x3]
    %v1017 = vlaneseq
    %v1018 = vshrl.u32 %v1017, 7
    %v1019 = vsub.s32 0, %v1018
    %v1020 = vrot.slane %v1015, %v1019
    %v1021 = vlaneseq
    %v1022 = vshrl.u32 %v1021, 7
    %v1023 = vsub.s32 1, %v1022
    %v1024 = vrot.slane %v1015, %v1023
    %v1027 = vmul.f32 %v969, %v1020
    %v1028 = vmul.f32 %v971, %v1024
    %v1029 = vmul.f32 %v975, %v1020
    %v1030 = vmul.f32 %v977, %v1024
    %v1031 = vmul.f32 %v981, %v1020
    %v1032 = vmul.f32 %v983, %v1024
    %v1033 = vmul.f32 %v987, %v1020
    %v1034 = vmul.f32 %v989, %v1024
    %v1035 = vmul.f32 %v993, %v1020
    %v1036 = vmul.f32 %v995, %v1024
    %v1037 = vmul.f32 %v999, %v1020
    %v1038 = vmul.f32 %v1001, %v1024
    %v1039 = vmul.f32 %v1005, %v1020
    %v1040 = vmul.f32 %v1007, %v1024
    %v1041 = vmul.f32 %v1011, %v1020
    %v1042 = vmul.f32 %v1013, %v1024
    %v1043 = vld [vmem:[%s9] sm:$0x3]
    %v1045 = vlaneseq
    %v1046 = vshrl.u32 %v1045, 7
    %v1047 = vsub.s32 0, %v1046
    %v1048 = vrot.slane %v1043, %v1047
    %v1049 = vlaneseq
    %v1050 = vshrl.u32 %v1049, 7
    %v1051 = vsub.s32 1, %v1050
    %v1052 = vrot.slane %v1043, %v1051
    %v1055 = vadd.f32 %v1027, %v1048
    %v1056 = vadd.f32 %v1028, %v1052
    %v1057 = vadd.f32 %v1029, %v1048
    %v1058 = vadd.f32 %v1030, %v1052
    %v1059 = vadd.f32 %v1031, %v1048
    %v1060 = vadd.f32 %v1032, %v1052
    %v1061 = vadd.f32 %v1033, %v1048
    %v1062 = vadd.f32 %v1034, %v1052
    %v1063 = vadd.f32 %v1035, %v1048
    %v1064 = vadd.f32 %v1036, %v1052
    %v1065 = vadd.f32 %v1037, %v1048
    %v1066 = vadd.f32 %v1038, %v1052
    %v1067 = vadd.f32 %v1039, %v1048
    %v1068 = vadd.f32 %v1040, %v1052
    %v1069 = vadd.f32 %v1041, %v1048
    %v1070 = vadd.f32 %v1042, %v1052
    %vm1071 = vcmp.ge.f32.partialorder %v1055, 0.0
    %vm1072 = vcmp.ge.f32.partialorder %v1056, 0.0
    %vm1073 = vcmp.ge.f32.partialorder %v1057, 0.0
    %vm1074 = vcmp.ge.f32.partialorder %v1058, 0.0
    %vm1075 = vcmp.ge.f32.partialorder %v1059, 0.0
    %vm1076 = vcmp.ge.f32.partialorder %v1060, 0.0
    %vm1077 = vcmp.ge.f32.partialorder %v1061, 0.0
    %vm1078 = vcmp.ge.f32.partialorder %v1062, 0.0
    %vm1079 = vcmp.ge.f32.partialorder %v1063, 0.0
    %vm1080 = vcmp.ge.f32.partialorder %v1064, 0.0
    %vm1081 = vcmp.ge.f32.partialorder %v1065, 0.0
    %vm1082 = vcmp.ge.f32.partialorder %v1066, 0.0
    %vm1083 = vcmp.ge.f32.partialorder %v1067, 0.0
    %vm1084 = vcmp.ge.f32.partialorder %v1068, 0.0
    %vm1085 = vcmp.ge.f32.partialorder %v1069, 0.0
    %vm1086 = vcmp.ge.f32.partialorder %v1070, 0.0
    %v1087 = vmul.f32 %v1055, 0.01
    %v1088 = vmul.f32 %v1056, 0.01
    %v1089 = vmul.f32 %v1057, 0.01
    %v1090 = vmul.f32 %v1058, 0.01
    %v1091 = vmul.f32 %v1059, 0.01
    %v1092 = vmul.f32 %v1060, 0.01
    %v1093 = vmul.f32 %v1061, 0.01
    %v1094 = vmul.f32 %v1062, 0.01
    %v1095 = vmul.f32 %v1063, 0.01
    %v1096 = vmul.f32 %v1064, 0.01
    %v1097 = vmul.f32 %v1065, 0.01
    %v1098 = vmul.f32 %v1066, 0.01
    %v1099 = vmul.f32 %v1067, 0.01
    %v1100 = vmul.f32 %v1068, 0.01
    %v1101 = vmul.f32 %v1069, 0.01
    %v1102 = vmul.f32 %v1070, 0.01
    %v1103 = vsel %vm1071, %v1055, %v1087
    %v1104 = vsel %vm1072, %v1056, %v1088
    %v1105 = vsel %vm1073, %v1057, %v1089
    %v1106 = vsel %vm1074, %v1058, %v1090
    %v1107 = vsel %vm1075, %v1059, %v1091
    %v1108 = vsel %vm1076, %v1060, %v1092
    %v1109 = vsel %vm1077, %v1061, %v1093
    %v1110 = vsel %vm1078, %v1062, %v1094
    %v1111 = vsel %vm1079, %v1063, %v1095
    %v1112 = vsel %vm1080, %v1064, %v1096
    %v1113 = vsel %vm1081, %v1065, %v1097
    %v1114 = vsel %vm1082, %v1066, %v1098
    %v1115 = vsel %vm1083, %v1067, %v1099
    %v1116 = vsel %vm1084, %v1068, %v1100
    %v1117 = vsel %vm1085, %v1069, %v1101
    %v1118 = vsel %vm1086, %v1070, %v1102
    %1119 = vmatprep.subr.mxu0 %v1104
    %1120 = vmatpush1.msra.mxu0 %v1103
    %1121 = vmatprep.subr.mxu0 %v1106
    %1122 = vmatpush1.msra.mxu0 %v1105
    %1123 = vmatprep.subr.mxu0 %v1108
    %1124 = vmatpush1.msra.mxu0 %v1107
    %1125 = vmatprep.subr.mxu0 %v1110
    %1126 = vmatpush1.msra.mxu0 %v1109
    %1127 = vmatprep.subr.mxu0 %v1112
    %1128 = vmatpush1.msra.mxu0 %v1111
    %1129 = vmatprep.subr.mxu0 %v1114
    %1130 = vmatpush1.msra.mxu0 %v1113
    %1131 = vmatprep.subr.mxu0 %v1116
    %1132 = vmatpush1.msra.mxu0 %v1115
    %1133 = vmatprep.subr.mxu0 %v1118
    %1134 = vmatpush1.msra.mxu0 %v1117
    %1135 = vmatprep.subr.mxu0 0.0
    %1136 = vmatpush1.msra.mxu0 0.0
    %1137 = vmatprep.subr.mxu0 0.0
    %1138 = vmatpush1.msra.mxu0 0.0
    %1139 = vmatprep.subr.mxu0 0.0
    %1140 = vmatpush1.msra.mxu0 0.0
    %1141 = vmatprep.subr.mxu0 0.0
    %1142 = vmatpush1.msra.mxu0 0.0
    %1143 = vmatprep.subr.mxu0 0.0
    %1144 = vmatpush1.msra.mxu0 0.0
    %1145 = vmatprep.subr.mxu0 0.0
    %1146 = vmatpush1.msra.mxu0 0.0
    %1147 = vmatprep.subr.mxu0 0.0
    %1148 = vmatpush1.msra.mxu0 0.0
    %1149 = vmatprep.subr.mxu0 0.0
    %1150 = vmatpush1.msra.mxu0 0.0
    %1151 = vmatprep.subr.mxu0 0.0
    %1152 = vmatpush1.msra.mxu0 0.0
    %1153 = vmatprep.subr.mxu0 0.0
    %1154 = vmatpush1.msra.mxu0 0.0
    %1155 = vmatprep.subr.mxu0 0.0
    %1156 = vmatpush1.msra.mxu0 0.0
    %1157 = vmatprep.subr.mxu0 0.0
    %1158 = vmatpush1.msra.mxu0 0.0
    %1159 = vmatprep.subr.mxu0 0.0
    %1160 = vmatpush1.msra.mxu0 0.0
    %1161 = vmatprep.subr.mxu0 0.0
    %1162 = vmatpush1.msra.mxu0 0.0
    %1163 = vmatprep.subr.mxu0 0.0
    %1164 = vmatpush1.msra.mxu0 0.0
    %1165 = vmatprep.subr.mxu0 0.0
    %1166 = vmatpush1.msra.mxu0 0.0
    %1167 = vmatprep.subr.mxu0 0.0
    %1168 = vmatpush1.msra.mxu0 0.0
    %1169 = vmatprep.subr.mxu0 0.0
    %1170 = vmatpush1.msra.mxu0 0.0
    %1171 = vmatprep.subr.mxu0 0.0
    %1172 = vmatpush1.msra.mxu0 0.0
    %1173 = vmatprep.subr.mxu0 0.0
    %1174 = vmatpush1.msra.mxu0 0.0
    %1175 = vmatprep.subr.mxu0 0.0
    %1176 = vmatpush1.msra.mxu0 0.0
    %1177 = vmatprep.subr.mxu0 0.0
    %1178 = vmatpush1.msra.mxu0 0.0
    %1179 = vmatprep.subr.mxu0 0.0
    %1180 = vmatpush1.msra.mxu0 0.0
    %1181 = vmatprep.subr.mxu0 0.0
    %1182 = vmatpush1.msra.mxu0 0.0
    %1183 = vmatprep.mubr.f32.mxu0 0.0
    %1184 = vmatmul.mubr.f32.gmra.mrb[0].mxu0 %v428
    %v1185 = vpop.f32.mrb[0].mxu0
    %v1186 = vadd.f32 0.0, %v1185
    %v1187 = vpop.f32.mrb[0].mxu0
    %v1188 = vadd.f32 0.0, %v1187
    %1189 = vmatprep.mubr.f32.mxu0 0.0
    %1190 = vmatmul.mubr.f32.gmra.mrb[0].mxu0 %v431
    %v1191 = vpop.f32.mrb[0].mxu0
    %v1192 = vadd.f32 0.0, %v1191
    %v1193 = vpop.f32.mrb[0].mxu0
    %v1194 = vadd.f32 0.0, %v1193
    %1195 = vmatprep.mubr.f32.mxu0 0.0
    %1196 = vmatmul.mubr.f32.gmra.mrb[0].mxu0 %v434
    %v1197 = vpop.f32.mrb[0].mxu0
    %v1198 = vadd.f32 0.0, %v1197
    %v1199 = vpop.f32.mrb[0].mxu0
    %v1200 = vadd.f32 0.0, %v1199
    %1201 = vmatprep.mubr.f32.mxu0 0.0
    %1202 = vmatmul.mubr.f32.gmra.mrb[0].mxu0 %v437
    %v1203 = vpop.f32.mrb[0].mxu0
    %v1204 = vadd.f32 0.0, %v1203
    %v1205 = vpop.f32.mrb[0].mxu0
    %v1206 = vadd.f32 0.0, %v1205
    %1207 = vmatprep.mubr.f32.mxu0 0.0
    %1208 = vmatmul.mubr.f32.gmra.mrb[0].mxu0 %v440
    %v1209 = vpop.f32.mrb[0].mxu0
    %v1210 = vadd.f32 0.0, %v1209
    %v1211 = vpop.f32.mrb[0].mxu0
    %v1212 = vadd.f32 0.0, %v1211
    %1213 = vmatprep.mubr.f32.mxu0 0.0
    %1214 = vmatmul.mubr.f32.gmra.mrb[0].mxu0 %v443
    %v1215 = vpop.f32.mrb[0].mxu0
    %v1216 = vadd.f32 0.0, %v1215
    %v1217 = vpop.f32.mrb[0].mxu0
    %v1218 = vadd.f32 0.0, %v1217
    %1219 = vmatprep.mubr.f32.mxu0 0.0
    %1220 = vmatmul.mubr.f32.gmra.mrb[0].mxu0 %v446
    %v1221 = vpop.f32.mrb[0].mxu0
    %v1222 = vadd.f32 0.0, %v1221
    %v1223 = vpop.f32.mrb[0].mxu0
    %v1224 = vadd.f32 0.0, %v1223
    %1225 = vmatprep.mubr.f32.mxu0 0.0
    %1226 = vmatmul.mubr.f32.gmra.mrb[0].mxu0 %v449
    %v1227 = vpop.f32.mrb[0].mxu0
    %v1228 = vadd.f32 0.0, %v1227
    %v1229 = vpop.f32.mrb[0].mxu0
    %v1230 = vadd.f32 0.0, %v1229
    %1231 = vdwg.mxu0
    %1232 = vmatprep.subr.mxu0 %v1104
    %1233 = vmatpush1.msra.mxu0 %v1103
    %1234 = vmatprep.subr.mxu0 %v1106
    %1235 = vmatpush1.msra.mxu0 %v1105
    %1236 = vmatprep.subr.mxu0 %v1108
    %1237 = vmatpush1.msra.mxu0 %v1107
    %1238 = vmatprep.subr.mxu0 %v1110
    %1239 = vmatpush1.msra.mxu0 %v1109
    %1240 = vmatprep.subr.mxu0 %v1112
    %1241 = vmatpush1.msra.mxu0 %v1111
    %1242 = vmatprep.subr.mxu0 %v1114
    %1243 = vmatpush1.msra.mxu0 %v1113
    %1244 = vmatprep.subr.mxu0 %v1116
    %1245 = vmatpush1.msra.mxu0 %v1115
    %1246 = vmatprep.subr.mxu0 %v1118
    %1247 = vmatpush1.msra.mxu0 %v1117
    %1248 = vmatprep.subr.mxu0 0.0
    %1249 = vmatpush1.msra.mxu0 0.0
    %1250 = vmatprep.subr.mxu0 0.0
    %1251 = vmatpush1.msra.mxu0 0.0
    %1252 = vmatprep.subr.mxu0 0.0
    %1253 = vmatpush1.msra.mxu0 0.0
    %1254 = vmatprep.subr.mxu0 0.0
    %1255 = vmatpush1.msra.mxu0 0.0
    %1256 = vmatprep.subr.mxu0 0.0
    %1257 = vmatpush1.msra.mxu0 0.0
    %1258 = vmatprep.subr.mxu0 0.0
    %1259 = vmatpush1.msra.mxu0 0.0
    %1260 = vmatprep.subr.mxu0 0.0
    %1261 = vmatpush1.msra.mxu0 0.0
    %1262 = vmatprep.subr.mxu0 0.0
    %1263 = vmatpush1.msra.mxu0 0.0
    %1264 = vmatprep.subr.mxu0 0.0
    %1265 = vmatpush1.msra.mxu0 0.0
    %1266 = vmatprep.subr.mxu0 0.0
    %1267 = vmatpush1.msra.mxu0 0.0
    %1268 = vmatprep.subr.mxu0 0.0
    %1269 = vmatpush1.msra.mxu0 0.0
    %1270 = vmatprep.subr.mxu0 0.0
    %1271 = vmatpush1.msra.mxu0 0.0
    %1272 = vmatprep.subr.mxu0 0.0
    %1273 = vmatpush1.msra.mxu0 0.0
    %1274 = vmatprep.subr.mxu0 0.0
    %1275 = vmatpush1.msra.mxu0 0.0
    %1276 = vmatprep.subr.mxu0 0.0
    %1277 = vmatpush1.msra.mxu0 0.0
    %1278 = vmatprep.subr.mxu0 0.0
    %1279 = vmatpush1.msra.mxu0 0.0
    %1280 = vmatprep.subr.mxu0 0.0
    %1281 = vmatpush1.msra.mxu0 0.0
    %1282 = vmatprep.subr.mxu0 0.0
    %1283 = vmatpush1.msra.mxu0 0.0
    %1284 = vmatprep.subr.mxu0 0.0
    %1285 = vmatpush1.msra.mxu0 0.0
    %1286 = vmatprep.subr.mxu0 0.0
    %1287 = vmatpush1.msra.mxu0 0.0
    %1288 = vmatprep.subr.mxu0 0.0
    %1289 = vmatpush1.msra.mxu0 0.0
    %1290 = vmatprep.subr.mxu0 0.0
    %1291 = vmatpush1.msra.mxu0 0.0
    %1292 = vmatprep.subr.mxu0 0.0
    %1293 = vmatpush1.msra.mxu0 0.0
    %1294 = vmatprep.subr.mxu0 0.0
    %1295 = vmatpush1.msra.mxu0 0.0
    %1296 = vmatprep.mubr.f32.mxu0 0.0
    %1297 = vmatmul.mubr.f32.gmra.mrb[0].mxu0 %v565
    %v1298 = vpop.f32.mrb[0].mxu0
    %v1299 = vadd.f32 0.0, %v1298
    %v1300 = vpop.f32.mrb[0].mxu0
    %v1301 = vadd.f32 0.0, %v1300
    %1302 = vmatprep.mubr.f32.mxu0 0.0
    %1303 = vmatmul.mubr.f32.gmra.mrb[0].mxu0 %v568
    %v1304 = vpop.f32.mrb[0].mxu0
    %v1305 = vadd.f32 0.0, %v1304
    %v1306 = vpop.f32.mrb[0].mxu0
    %v1307 = vadd.f32 0.0, %v1306
    %1308 = vmatprep.mubr.f32.mxu0 0.0
    %1309 = vmatmul.mubr.f32.gmra.mrb[0].mxu0 %v571
    %v1310 = vpop.f32.mrb[0].mxu0
    %v1311 = vadd.f32 0.0, %v1310
    %v1312 = vpop.f32.mrb[0].mxu0
    %v1313 = vadd.f32 0.0, %v1312
    %1314 = vmatprep.mubr.f32.mxu0 0.0
    %1315 = vmatmul.mubr.f32.gmra.mrb[0].mxu0 %v574
    %v1316 = vpop.f32.mrb[0].mxu0
    %v1317 = vadd.f32 0.0, %v1316
    %v1318 = vpop.f32.mrb[0].mxu0
    %v1319 = vadd.f32 0.0, %v1318
    %1320 = vmatprep.mubr.f32.mxu0 0.0
    %1321 = vmatmul.mubr.f32.gmra.mrb[0].mxu0 %v577
    %v1322 = vpop.f32.mrb[0].mxu0
    %v1323 = vadd.f32 0.0, %v1322
    %v1324 = vpop.f32.mrb[0].mxu0
    %v1325 = vadd.f32 0.0, %v1324
    %1326 = vmatprep.mubr.f32.mxu0 0.0
    %1327 = vmatmul.mubr.f32.gmra.mrb[0].mxu0 %v580
    %v1328 = vpop.f32.mrb[0].mxu0
    %v1329 = vadd.f32 0.0, %v1328
    %v1330 = vpop.f32.mrb[0].mxu0
    %v1331 = vadd.f32 0.0, %v1330
    %1332 = vmatprep.mubr.f32.mxu0 0.0
    %1333 = vmatmul.mubr.f32.gmra.mrb[0].mxu0 %v583
    %v1334 = vpop.f32.mrb[0].mxu0
    %v1335 = vadd.f32 0.0, %v1334
    %v1336 = vpop.f32.mrb[0].mxu0
    %v1337 = vadd.f32 0.0, %v1336
    %1338 = vmatprep.mubr.f32.mxu0 0.0
    %1339 = vmatmul.mubr.f32.gmra.mrb[0].mxu0 %v586
    %v1340 = vpop.f32.mrb[0].mxu0
    %v1341 = vadd.f32 0.0, %v1340
    %v1342 = vpop.f32.mrb[0].mxu0
    %v1343 = vadd.f32 0.0, %v1342
    %1344 = vdwg.mxu0
    %v1345 = vld [vmem:[#allocation4] sm:$0xff]
    %v1346 = vld [vmem:[#allocation4 + $0x8] sm:$0xff]
    %v1347 = vld [vmem:[#allocation4 + $0x10] sm:$0xff]
    %v1348 = vld [vmem:[#allocation4 + $0x18] sm:$0xff]
    %v1349 = vld [vmem:[#allocation4 + $0x20] sm:$0xff]
    %v1350 = vld [vmem:[#allocation4 + $0x28] sm:$0xff]
    %v1351 = vld [vmem:[#allocation4 + $0x30] sm:$0xff]
    %v1352 = vld [vmem:[#allocation4 + $0x38] sm:$0xff]
    %v1353 = vld [vmem:[#allocation4 + $0x40] sm:$0xff]
    %v1354 = vld [vmem:[#allocation4 + $0x48] sm:$0xff]
    %v1355 = vld [vmem:[#allocation4 + $0x50] sm:$0xff]
    %v1356 = vld [vmem:[#allocation4 + $0x58] sm:$0xff]
    %v1357 = vld [vmem:[#allocation4 + $0x60] sm:$0xff]
    %v1358 = vld [vmem:[#allocation4 + $0x68] sm:$0xff]
    %v1359 = vld [vmem:[#allocation4 + $0x70] sm:$0xff]
    %v1360 = vld [vmem:[#allocation4 + $0x78] sm:$0xff]
    %v1361 = vld [vmem:[#allocation4 + $0x80] sm:$0xff]
    %v1362 = vld [vmem:[#allocation4 + $0x88] sm:$0xff]
    %v1363 = vld [vmem:[#allocation4 + $0x90] sm:$0xff]
    %v1364 = vld [vmem:[#allocation4 + $0x98] sm:$0xff]
    %v1365 = vld [vmem:[#allocation4 + $0xa0] sm:$0xff]
    %v1366 = vld [vmem:[#allocation4 + $0xa8] sm:$0xff]
    %v1367 = vld [vmem:[#allocation4 + $0xb0] sm:$0xff]
    %v1368 = vld [vmem:[#allocation4 + $0xb8] sm:$0xff]
    %v1369 = vld [vmem:[#allocation4 + $0xc0] sm:$0xff]
    %v1370 = vld [vmem:[#allocation4 + $0xc8] sm:$0xff]
    %v1371 = vld [vmem:[#allocation4 + $0xd0] sm:$0xff]
    %v1372 = vld [vmem:[#allocation4 + $0xd8] sm:$0xff]
    %v1373 = vld [vmem:[#allocation4 + $0xe0] sm:$0xff]
    %v1374 = vld [vmem:[#allocation4 + $0xe8] sm:$0xff]
    %v1375 = vld [vmem:[#allocation4 + $0xf0] sm:$0xff]
    %v1376 = vld [vmem:[#allocation4 + $0xf8] sm:$0xff]
    %v1377 = vld [vmem:[#allocation4 + $0x100] sm:$0xff]
    %v1378 = vld [vmem:[#allocation4 + $0x108] sm:$0xff]
    %v1379 = vld [vmem:[#allocation4 + $0x110] sm:$0xff]
    %v1380 = vld [vmem:[#allocation4 + $0x118] sm:$0xff]
    %v1381 = vld [vmem:[#allocation4 + $0x120] sm:$0xff]
    %v1382 = vld [vmem:[#allocation4 + $0x128] sm:$0xff]
    %v1383 = vld [vmem:[#allocation4 + $0x130] sm:$0xff]
    %v1384 = vld [vmem:[#allocation4 + $0x138] sm:$0xff]
    %v1385 = vld [vmem:[#allocation4 + $0x140] sm:$0xff]
    %v1386 = vld [vmem:[#allocation4 + $0x148] sm:$0xff]
    %v1387 = vld [vmem:[#allocation4 + $0x150] sm:$0xff]
    %v1388 = vld [vmem:[#allocation4 + $0x158] sm:$0xff]
    %v1389 = vld [vmem:[#allocation4 + $0x160] sm:$0xff]
    %v1390 = vld [vmem:[#allocation4 + $0x168] sm:$0xff]
    %v1391 = vld [vmem:[#allocation4 + $0x170] sm:$0xff]
    %v1392 = vld [vmem:[#allocation4 + $0x178] sm:$0xff]
    %v1393 = vld [vmem:[#allocation4 + $0x180] sm:$0xff]
    %v1394 = vld [vmem:[#allocation4 + $0x188] sm:$0xff]
    %v1395 = vld [vmem:[#allocation4 + $0x190] sm:$0xff]
    %v1396 = vld [vmem:[#allocation4 + $0x198] sm:$0xff]
    %v1397 = vld [vmem:[#allocation4 + $0x1a0] sm:$0xff]
    %v1398 = vld [vmem:[#allocation4 + $0x1a8] sm:$0xff]
    %v1399 = vld [vmem:[#allocation4 + $0x1b0] sm:$0xff]
    %v1400 = vld [vmem:[#allocation4 + $0x1b8] sm:$0xff]
    %v1401 = vld [vmem:[#allocation4 + $0x1c0] sm:$0xff]
    %v1402 = vld [vmem:[#allocation4 + $0x1c8] sm:$0xff]
    %v1403 = vld [vmem:[#allocation4 + $0x1d0] sm:$0xff]
    %v1404 = vld [vmem:[#allocation4 + $0x1d8] sm:$0xff]
    %v1405 = vld [vmem:[#allocation4 + $0x1e0] sm:$0xff]
    %v1406 = vld [vmem:[#allocation4 + $0x1e8] sm:$0xff]
    %v1407 = vld [vmem:[#allocation4 + $0x1f0] sm:$0xff]
    %v1408 = vld [vmem:[#allocation4 + $0x1f8] sm:$0xff]
    %v1409 = vld [vmem:[#allocation4 + $0x200] sm:$0xff]
    %v1410 = vld [vmem:[#allocation4 + $0x208] sm:$0xff]
    %v1411 = vld [vmem:[#allocation4 + $0x210] sm:$0xff]
    %v1412 = vld [vmem:[#allocation4 + $0x218] sm:$0xff]
    %v1413 = vld [vmem:[#allocation4 + $0x220] sm:$0xff]
    %v1414 = vld [vmem:[#allocation4 + $0x228] sm:$0xff]
    %v1415 = vld [vmem:[#allocation4 + $0x230] sm:$0xff]
    %v1416 = vld [vmem:[#allocation4 + $0x238] sm:$0xff]
    %v1417 = vld [vmem:[#allocation4 + $0x240] sm:$0xff]
    %v1418 = vld [vmem:[#allocation4 + $0x248] sm:$0xff]
    %v1419 = vld [vmem:[#allocation4 + $0x250] sm:$0xff]
    %v1420 = vld [vmem:[#allocation4 + $0x258] sm:$0xff]
    %v1421 = vld [vmem:[#allocation4 + $0x260] sm:$0xff]
    %v1422 = vld [vmem:[#allocation4 + $0x268] sm:$0xff]
    %v1423 = vld [vmem:[#allocation4 + $0x270] sm:$0xff]
    %v1424 = vld [vmem:[#allocation4 + $0x278] sm:$0xff]
    %v1425 = vld [vmem:[#allocation4 + $0x280] sm:$0xff]
    %v1426 = vld [vmem:[#allocation4 + $0x288] sm:$0xff]
    %v1427 = vld [vmem:[#allocation4 + $0x290] sm:$0xff]
    %v1428 = vld [vmem:[#allocation4 + $0x298] sm:$0xff]
    %v1429 = vld [vmem:[#allocation4 + $0x2a0] sm:$0xff]
    %v1430 = vld [vmem:[#allocation4 + $0x2a8] sm:$0xff]
    %v1431 = vld [vmem:[#allocation4 + $0x2b0] sm:$0xff]
    %v1432 = vld [vmem:[#allocation4 + $0x2b8] sm:$0xff]
    %v1433 = vld [vmem:[#allocation4 + $0x2c0] sm:$0xff]
    %v1434 = vld [vmem:[#allocation4 + $0x2c8] sm:$0xff]
    %v1435 = vld [vmem:[#allocation4 + $0x2d0] sm:$0xff]
    %v1436 = vld [vmem:[#allocation4 + $0x2d8] sm:$0xff]
    %v1437 = vld [vmem:[#allocation4 + $0x2e0] sm:$0xff]
    %v1438 = vld [vmem:[#allocation4 + $0x2e8] sm:$0xff]
    %v1439 = vld [vmem:[#allocation4 + $0x2f0] sm:$0xff]
    %v1440 = vld [vmem:[#allocation4 + $0x2f8] sm:$0xff]
    %v1441 = vld [vmem:[#allocation4 + $0x300] sm:$0xff]
    %v1442 = vld [vmem:[#allocation4 + $0x308] sm:$0xff]
    %v1443 = vld [vmem:[#allocation4 + $0x310] sm:$0xff]
    %v1444 = vld [vmem:[#allocation4 + $0x318] sm:$0xff]
    %v1445 = vld [vmem:[#allocation4 + $0x320] sm:$0xff]
    %v1446 = vld [vmem:[#allocation4 + $0x328] sm:$0xff]
    %v1447 = vld [vmem:[#allocation4 + $0x330] sm:$0xff]
    %v1448 = vld [vmem:[#allocation4 + $0x338] sm:$0xff]
    %v1449 = vld [vmem:[#allocation4 + $0x340] sm:$0xff]
    %v1450 = vld [vmem:[#allocation4 + $0x348] sm:$0xff]
    %v1451 = vld [vmem:[#allocation4 + $0x350] sm:$0xff]
    %v1452 = vld [vmem:[#allocation4 + $0x358] sm:$0xff]
    %v1453 = vld [vmem:[#allocation4 + $0x360] sm:$0xff]
    %v1454 = vld [vmem:[#allocation4 + $0x368] sm:$0xff]
    %v1455 = vld [vmem:[#allocation4 + $0x370] sm:$0xff]
    %v1456 = vld [vmem:[#allocation4 + $0x378] sm:$0xff]
    %v1457 = vld [vmem:[#allocation4 + $0x380] sm:$0xff]
    %v1458 = vld [vmem:[#allocation4 + $0x388] sm:$0xff]
    %v1459 = vld [vmem:[#allocation4 + $0x390] sm:$0xff]
    %v1460 = vld [vmem:[#allocation4 + $0x398] sm:$0xff]
    %v1461 = vld [vmem:[#allocation4 + $0x3a0] sm:$0xff]
    %v1462 = vld [vmem:[#allocation4 + $0x3a8] sm:$0xff]
    %v1463 = vld [vmem:[#allocation4 + $0x3b0] sm:$0xff]
    %v1464 = vld [vmem:[#allocation4 + $0x3b8] sm:$0xff]
    %v1465 = vld [vmem:[#allocation4 + $0x3c0] sm:$0xff]
    %v1466 = vld [vmem:[#allocation4 + $0x3c8] sm:$0xff]
    %v1467 = vld [vmem:[#allocation4 + $0x3d0] sm:$0xff]
    %v1468 = vld [vmem:[#allocation4 + $0x3d8] sm:$0xff]
    %v1469 = vld [vmem:[#allocation4 + $0x3e0] sm:$0xff]
    %v1470 = vld [vmem:[#allocation4 + $0x3e8] sm:$0xff]
    %v1471 = vld [vmem:[#allocation4 + $0x3f0] sm:$0xff]
    %v1472 = vld [vmem:[#allocation4 + $0x3f8] sm:$0xff]
    %v1473 = vld [vmem:[#allocation4 + $0x400] sm:$0xff]
    %v1474 = vld [vmem:[#allocation4 + $0x408] sm:$0xff]
    %v1475 = vld [vmem:[#allocation4 + $0x410] sm:$0xff]
    %v1476 = vld [vmem:[#allocation4 + $0x418] sm:$0xff]
    %v1477 = vld [vmem:[#allocation4 + $0x420] sm:$0xff]
    %v1478 = vld [vmem:[#allocation4 + $0x428] sm:$0xff]
    %v1479 = vld [vmem:[#allocation4 + $0x430] sm:$0xff]
    %v1480 = vld [vmem:[#allocation4 + $0x438] sm:$0xff]
    %v1481 = vld [vmem:[#allocation4 + $0x440] sm:$0xff]
    %v1482 = vld [vmem:[#allocation4 + $0x448] sm:$0xff]
    %v1483 = vld [vmem:[#allocation4 + $0x450] sm:$0xff]
    %v1484 = vld [vmem:[#allocation4 + $0x458] sm:$0xff]
    %v1485 = vld [vmem:[#allocation4 + $0x460] sm:$0xff]
    %v1486 = vld [vmem:[#allocation4 + $0x468] sm:$0xff]
    %v1487 = vld [vmem:[#allocation4 + $0x470] sm:$0xff]
    %v1488 = vld [vmem:[#allocation4 + $0x478] sm:$0xff]
    %v1489 = vld [vmem:[#allocation4 + $0x480] sm:$0xff]
    %v1490 = vld [vmem:[#allocation4 + $0x488] sm:$0xff]
    %v1491 = vld [vmem:[#allocation4 + $0x490] sm:$0xff]
    %v1492 = vld [vmem:[#allocation4 + $0x498] sm:$0xff]
    %v1493 = vld [vmem:[#allocation4 + $0x4a0] sm:$0xff]
    %v1494 = vld [vmem:[#allocation4 + $0x4a8] sm:$0xff]
    %v1495 = vld [vmem:[#allocation4 + $0x4b0] sm:$0xff]
    %v1496 = vld [vmem:[#allocation4 + $0x4b8] sm:$0xff]
    %v1497 = vld [vmem:[#allocation4 + $0x4c0] sm:$0xff]
    %v1498 = vld [vmem:[#allocation4 + $0x4c8] sm:$0xff]
    %v1499 = vld [vmem:[#allocation4 + $0x4d0] sm:$0xff]
    %v1500 = vld [vmem:[#allocation4 + $0x4d8] sm:$0xff]
    %v1501 = vld [vmem:[#allocation4 + $0x4e0] sm:$0xff]
    %v1502 = vld [vmem:[#allocation4 + $0x4e8] sm:$0xff]
    %v1503 = vld [vmem:[#allocation4 + $0x4f0] sm:$0xff]
    %v1504 = vld [vmem:[#allocation4 + $0x4f8] sm:$0xff]
    %v1505 = vld [vmem:[#allocation4 + $0x500] sm:$0xff]
    %v1506 = vld [vmem:[#allocation4 + $0x508] sm:$0xff]
    %v1507 = vld [vmem:[#allocation4 + $0x510] sm:$0xff]
    %v1508 = vld [vmem:[#allocation4 + $0x518] sm:$0xff]
    %v1509 = vld [vmem:[#allocation4 + $0x520] sm:$0xff]
    %v1510 = vld [vmem:[#allocation4 + $0x528] sm:$0xff]
    %v1511 = vld [vmem:[#allocation4 + $0x530] sm:$0xff]
    %v1512 = vld [vmem:[#allocation4 + $0x538] sm:$0xff]
    %v1513 = vld [vmem:[#allocation4 + $0x540] sm:$0xff]
    %v1514 = vld [vmem:[#allocation4 + $0x548] sm:$0xff]
    %v1515 = vld [vmem:[#allocation4 + $0x550] sm:$0xff]
    %v1516 = vld [vmem:[#allocation4 + $0x558] sm:$0xff]
    %v1517 = vld [vmem:[#allocation4 + $0x560] sm:$0xff]
    %v1518 = vld [vmem:[#allocation4 + $0x568] sm:$0xff]
    %v1519 = vld [vmem:[#allocation4 + $0x570] sm:$0xff]
    %v1520 = vld [vmem:[#allocation4 + $0x578] sm:$0xff]
    %v1521 = vld [vmem:[#allocation4 + $0x580] sm:$0xff]
    %v1522 = vld [vmem:[#allocation4 + $0x588] sm:$0xff]
    %v1523 = vld [vmem:[#allocation4 + $0x590] sm:$0xff]
    %v1524 = vld [vmem:[#allocation4 + $0x598] sm:$0xff]
    %v1525 = vld [vmem:[#allocation4 + $0x5a0] sm:$0xff]
    %v1526 = vld [vmem:[#allocation4 + $0x5a8] sm:$0xff]
    %v1527 = vld [vmem:[#allocation4 + $0x5b0] sm:$0xff]
    %v1528 = vld [vmem:[#allocation4 + $0x5b8] sm:$0xff]
    %v1529 = vld [vmem:[#allocation4 + $0x5c0] sm:$0xff]
    %v1530 = vld [vmem:[#allocation4 + $0x5c8] sm:$0xff]
    %v1531 = vld [vmem:[#allocation4 + $0x5d0] sm:$0xff]
    %v1532 = vld [vmem:[#allocation4 + $0x5d8] sm:$0xff]
    %v1533 = vld [vmem:[#allocation4 + $0x5e0] sm:$0xff]
    %v1534 = vld [vmem:[#allocation4 + $0x5e8] sm:$0xff]
    %v1535 = vld [vmem:[#allocation4 + $0x5f0] sm:$0xff]
    %v1536 = vld [vmem:[#allocation4 + $0x5f8] sm:$0xff]
    %1537 = vmatprep.subr.mxu0 %v1346
    %1538 = vmatpush1.msra.mxu0 %v1345
    %1539 = vmatprep.subr.mxu0 %v1348
    %1540 = vmatpush1.msra.mxu0 %v1347
    %1541 = vmatprep.subr.mxu0 %v1350
    %1542 = vmatpush1.msra.mxu0 %v1349
    %1543 = vmatprep.subr.mxu0 %v1352
    %1544 = vmatpush1.msra.mxu0 %v1351
    %1545 = vmatprep.subr.mxu0 %v1354
    %1546 = vmatpush1.msra.mxu0 %v1353
    %1547 = vmatprep.subr.mxu0 %v1356
    %1548 = vmatpush1.msra.mxu0 %v1355
    %1549 = vmatprep.subr.mxu0 %v1358
    %1550 = vmatpush1.msra.mxu0 %v1357
    %1551 = vmatprep.subr.mxu0 %v1360
    %1552 = vmatpush1.msra.mxu0 %v1359
    %1553 = vmatprep.subr.mxu0 %v1362
    %1554 = vmatpush1.msra.mxu0 %v1361
    %1555 = vmatprep.subr.mxu0 %v1364
    %1556 = vmatpush1.msra.mxu0 %v1363
    %1557 = vmatprep.subr.mxu0 %v1366
    %1558 = vmatpush1.msra.mxu0 %v1365
    %1559 = vmatprep.subr.mxu0 %v1368
    %1560 = vmatpush1.msra.mxu0 %v1367
    %1561 = vmatprep.subr.mxu0 %v1370
    %1562 = vmatpush1.msra.mxu0 %v1369
    %1563 = vmatprep.subr.mxu0 %v1372
    %1564 = vmatpush1.msra.mxu0 %v1371
    %1565 = vmatprep.subr.mxu0 %v1374
    %1566 = vmatpush1.msra.mxu0 %v1373
    %1567 = vmatprep.subr.mxu0 %v1376
    %1568 = vmatpush1.msra.mxu0 %v1375
    %1569 = vmatprep.subr.mxu0 %v1378
    %1570 = vmatpush1.msra.mxu0 %v1377
    %1571 = vmatprep.subr.mxu0 %v1380
    %1572 = vmatpush1.msra.mxu0 %v1379
    %1573 = vmatprep.subr.mxu0 %v1382
    %1574 = vmatpush1.msra.mxu0 %v1381
    %1575 = vmatprep.subr.mxu0 %v1384
    %1576 = vmatpush1.msra.mxu0 %v1383
    %1577 = vmatprep.subr.mxu0 %v1386
    %1578 = vmatpush1.msra.mxu0 %v1385
    %1579 = vmatprep.subr.mxu0 %v1388
    %1580 = vmatpush1.msra.mxu0 %v1387
    %1581 = vmatprep.subr.mxu0 %v1390
    %1582 = vmatpush1.msra.mxu0 %v1389
    %1583 = vmatprep.subr.mxu0 %v1392
    %1584 = vmatpush1.msra.mxu0 %v1391
    %1585 = vmatprep.subr.mxu0 %v1394
    %1586 = vmatpush1.msra.mxu0 %v1393
    %1587 = vmatprep.subr.mxu0 %v1396
    %1588 = vmatpush1.msra.mxu0 %v1395
    %1589 = vmatprep.subr.mxu0 %v1398
    %1590 = vmatpush1.msra.mxu0 %v1397
    %1591 = vmatprep.subr.mxu0 %v1400
    %1592 = vmatpush1.msra.mxu0 %v1399
    %1593 = vmatprep.subr.mxu0 %v1402
    %1594 = vmatpush1.msra.mxu0 %v1401
    %1595 = vmatprep.subr.mxu0 %v1404
    %1596 = vmatpush1.msra.mxu0 %v1403
    %1597 = vmatprep.subr.mxu0 %v1406
    %1598 = vmatpush1.msra.mxu0 %v1405
    %1599 = vmatprep.subr.mxu0 %v1408
    %1600 = vmatpush1.msra.mxu0 %v1407
    %1601 = vmatprep.mubr.f32.mxu0 %v1188
    %1602 = vmatmul.mubr.f32.gmra.mrb[0].mxu0 %v1186
    %v1603 = vpop.f32.mrb[0].mxu0
    %v1604 = vadd.f32 0.0, %v1603
    %v1605 = vpop.f32.mrb[0].mxu0
    %v1606 = vadd.f32 0.0, %v1605
    %1607 = vmatprep.mubr.f32.mxu0 %v1194
    %1608 = vmatmul.mubr.f32.gmra.mrb[0].mxu0 %v1192
    %v1609 = vpop.f32.mrb[0].mxu0
    %v1610 = vadd.f32 0.0, %v1609
    %v1611 = vpop.f32.mrb[0].mxu0
    %v1612 = vadd.f32 0.0, %v1611
    %1613 = vmatprep.mubr.f32.mxu0 %v1200
    %1614 = vmatmul.mubr.f32.gmra.mrb[0].mxu0 %v1198
    %v1615 = vpop.f32.mrb[0].mxu0
    %v1616 = vadd.f32 0.0, %v1615
    %v1617 = vpop.f32.mrb[0].mxu0
    %v1618 = vadd.f32 0.0, %v1617
    %1619 = vmatprep.mubr.f32.mxu0 %v1206
    %1620 = vmatmul.mubr.f32.gmra.mrb[0].mxu0 %v1204
    %v1621 = vpop.f32.mrb[0].mxu0
    %v1622 = vadd.f32 0.0, %v1621
    %v1623 = vpop.f32.mrb[0].mxu0
    %v1624 = vadd.f32 0.0, %v1623
    %1625 = vmatprep.mubr.f32.mxu0 %v1212
    %1626 = vmatmul.mubr.f32.gmra.mrb[0].mxu0 %v1210
    %v1627 = vpop.f32.mrb[0].mxu0
    %v1628 = vadd.f32 0.0, %v1627
    %v1629 = vpop.f32.mrb[0].mxu0
    %v1630 = vadd.f32 0.0, %v1629
    %1631 = vmatprep.mubr.f32.mxu0 %v1218
    %1632 = vmatmul.mubr.f32.gmra.mrb[0].mxu0 %v1216
    %v1633 = vpop.f32.mrb[0].mxu0
    %v1634 = vadd.f32 0.0, %v1633
    %v1635 = vpop.f32.mrb[0].mxu0
    %v1636 = vadd.f32 0.0, %v1635
    %1637 = vmatprep.mubr.f32.mxu0 %v1224
    %1638 = vmatmul.mubr.f32.gmra.mrb[0].mxu0 %v1222
    %v1639 = vpop.f32.mrb[0].mxu0
    %v1640 = vadd.f32 0.0, %v1639
    %v1641 = vpop.f32.mrb[0].mxu0
    %v1642 = vadd.f32 0.0, %v1641
    %1643 = vmatprep.mubr.f32.mxu0 %v1230
    %1644 = vmatmul.mubr.f32.gmra.mrb[0].mxu0 %v1228
    %v1645 = vpop.f32.mrb[0].mxu0
    %v1646 = vadd.f32 0.0, %v1645
    %v1647 = vpop.f32.mrb[0].mxu0
    %v1648 = vadd.f32 0.0, %v1647
    %1649 = vdwg.mxu0
    %1650 = vmatprep.subr.mxu0 %v1410
    %1651 = vmatpush1.msra.mxu0 %v1409
    %1652 = vmatprep.subr.mxu0 %v1412
    %1653 = vmatpush1.msra.mxu0 %v1411
    %1654 = vmatprep.subr.mxu0 %v1414
    %1655 = vmatpush1.msra.mxu0 %v1413
    %1656 = vmatprep.subr.mxu0 %v1416
    %1657 = vmatpush1.msra.mxu0 %v1415
    %1658 = vmatprep.subr.mxu0 %v1418
    %1659 = vmatpush1.msra.mxu0 %v1417
    %1660 = vmatprep.subr.mxu0 %v1420
    %1661 = vmatpush1.msra.mxu0 %v1419
    %1662 = vmatprep.subr.mxu0 %v1422
    %1663 = vmatpush1.msra.mxu0 %v1421
    %1664 = vmatprep.subr.mxu0 %v1424
    %1665 = vmatpush1.msra.mxu0 %v1423
    %1666 = vmatprep.subr.mxu0 %v1426
    %1667 = vmatpush1.msra.mxu0 %v1425
    %1668 = vmatprep.subr.mxu0 %v1428
    %1669 = vmatpush1.msra.mxu0 %v1427
    %1670 = vmatprep.subr.mxu0 %v1430
    %1671 = vmatpush1.msra.mxu0 %v1429
    %1672 = vmatprep.subr.mxu0 %v1432
    %1673 = vmatpush1.msra.mxu0 %v1431
    %1674 = vmatprep.subr.mxu0 %v1434
    %1675 = vmatpush1.msra.mxu0 %v1433
    %1676 = vmatprep.subr.mxu0 %v1436
    %1677 = vmatpush1.msra.mxu0 %v1435
    %1678 = vmatprep.subr.mxu0 %v1438
    %1679 = vmatpush1.msra.mxu0 %v1437
    %1680 = vmatprep.subr.mxu0 %v1440
    %1681 = vmatpush1.msra.mxu0 %v1439
    %1682 = vmatprep.subr.mxu0 %v1442
    %1683 = vmatpush1.msra.mxu0 %v1441
    %1684 = vmatprep.subr.mxu0 %v1444
    %1685 = vmatpush1.msra.mxu0 %v1443
    %1686 = vmatprep.subr.mxu0 %v1446
    %1687 = vmatpush1.msra.mxu0 %v1445
    %1688 = vmatprep.subr.mxu0 %v1448
    %1689 = vmatpush1.msra.mxu0 %v1447
    %1690 = vmatprep.subr.mxu0 %v1450
    %1691 = vmatpush1.msra.mxu0 %v1449
    %1692 = vmatprep.subr.mxu0 %v1452
    %1693 = vmatpush1.msra.mxu0 %v1451
    %1694 = vmatprep.subr.mxu0 %v1454
    %1695 = vmatpush1.msra.mxu0 %v1453
    %1696 = vmatprep.subr.mxu0 %v1456
    %1697 = vmatpush1.msra.mxu0 %v1455
    %1698 = vmatprep.subr.mxu0 %v1458
    %1699 = vmatpush1.msra.mxu0 %v1457
    %1700 = vmatprep.subr.mxu0 %v1460
    %1701 = vmatpush1.msra.mxu0 %v1459
    %1702 = vmatprep.subr.mxu0 %v1462
    %1703 = vmatpush1.msra.mxu0 %v1461
    %1704 = vmatprep.subr.mxu0 %v1464
    %1705 = vmatpush1.msra.mxu0 %v1463
    %1706 = vmatprep.subr.mxu0 %v1466
    %1707 = vmatpush1.msra.mxu0 %v1465
    %1708 = vmatprep.subr.mxu0 %v1468
    %1709 = vmatpush1.msra.mxu0 %v1467
    %1710 = vmatprep.subr.mxu0 %v1470
    %1711 = vmatpush1.msra.mxu0 %v1469
    %1712 = vmatprep.subr.mxu0 %v1472
    %1713 = vmatpush1.msra.mxu0 %v1471
    %1714 = vmatprep.mubr.f32.mxu0 %v1104
    %1715 = vmatmul.mubr.f32.gmra.mrb[0].mxu0 %v1103
    %v1716 = vpop.f32.mrb[0].mxu0
    %v1717 = vadd.f32 %v1604, %v1716
    %v1718 = vpop.f32.mrb[0].mxu0
    %v1719 = vadd.f32 %v1606, %v1718
    %1720 = vmatprep.mubr.f32.mxu0 %v1106
    %1721 = vmatmul.mubr.f32.gmra.mrb[0].mxu0 %v1105
    %v1722 = vpop.f32.mrb[0].mxu0
    %v1723 = vadd.f32 %v1610, %v1722
    %v1724 = vpop.f32.mrb[0].mxu0
    %v1725 = vadd.f32 %v1612, %v1724
    %1726 = vmatprep.mubr.f32.mxu0 %v1108
    %1727 = vmatmul.mubr.f32.gmra.mrb[0].mxu0 %v1107
    %v1728 = vpop.f32.mrb[0].mxu0
    %v1729 = vadd.f32 %v1616, %v1728
    %v1730 = vpop.f32.mrb[0].mxu0
    %v1731 = vadd.f32 %v1618, %v1730
    %1732 = vmatprep.mubr.f32.mxu0 %v1110
    %1733 = vmatmul.mubr.f32.gmra.mrb[0].mxu0 %v1109
    %v1734 = vpop.f32.mrb[0].mxu0
    %v1735 = vadd.f32 %v1622, %v1734
    %v1736 = vpop.f32.mrb[0].mxu0
    %v1737 = vadd.f32 %v1624, %v1736
    %1738 = vmatprep.mubr.f32.mxu0 %v1112
    %1739 = vmatmul.mubr.f32.gmra.mrb[0].mxu0 %v1111
    %v1740 = vpop.f32.mrb[0].mxu0
    %v1741 = vadd.f32 %v1628, %v1740
    %v1742 = vpop.f32.mrb[0].mxu0
    %v1743 = vadd.f32 %v1630, %v1742
    %1744 = vmatprep.mubr.f32.mxu0 %v1114
    %1745 = vmatmul.mubr.f32.gmra.mrb[0].mxu0 %v1113
    %v1746 = vpop.f32.mrb[0].mxu0
    %v1747 = vadd.f32 %v1634, %v1746
    %v1748 = vpop.f32.mrb[0].mxu0
    %v1749 = vadd.f32 %v1636, %v1748
    %1750 = vmatprep.mubr.f32.mxu0 %v1116
    %1751 = vmatmul.mubr.f32.gmra.mrb[0].mxu0 %v1115
    %v1752 = vpop.f32.mrb[0].mxu0
    %v1753 = vadd.f32 %v1640, %v1752
    %v1754 = vpop.f32.mrb[0].mxu0
    %v1755 = vadd.f32 %v1642, %v1754
    %1756 = vmatprep.mubr.f32.mxu0 %v1118
    %1757 = vmatmul.mubr.f32.gmra.mrb[0].mxu0 %v1117
    %v1758 = vpop.f32.mrb[0].mxu0
    %v1759 = vadd.f32 %v1646, %v1758
    %v1760 = vpop.f32.mrb[0].mxu0
    %v1761 = vadd.f32 %v1648, %v1760
    %1762 = vdwg.mxu0
    %1763 = vmatprep.subr.mxu0 %v1474
    %1764 = vmatpush1.msra.mxu0 %v1473
    %1765 = vmatprep.subr.mxu0 %v1476
    %1766 = vmatpush1.msra.mxu0 %v1475
    %1767 = vmatprep.subr.mxu0 %v1478
    %1768 = vmatpush1.msra.mxu0 %v1477
    %1769 = vmatprep.subr.mxu0 %v1480
    %1770 = vmatpush1.msra.mxu0 %v1479
    %1771 = vmatprep.subr.mxu0 %v1482
    %1772 = vmatpush1.msra.mxu0 %v1481
    %1773 = vmatprep.subr.mxu0 %v1484
    %1774 = vmatpush1.msra.mxu0 %v1483
    %1775 = vmatprep.subr.mxu0 %v1486
    %1776 = vmatpush1.msra.mxu0 %v1485
    %1777 = vmatprep.subr.mxu0 %v1488
    %1778 = vmatpush1.msra.mxu0 %v1487
    %1779 = vmatprep.subr.mxu0 %v1490
    %1780 = vmatpush1.msra.mxu0 %v1489
    %1781 = vmatprep.subr.mxu0 %v1492
    %1782 = vmatpush1.msra.mxu0 %v1491
    %1783 = vmatprep.subr.mxu0 %v1494
    %1784 = vmatpush1.msra.mxu0 %v1493
    %1785 = vmatprep.subr.mxu0 %v1496
    %1786 = vmatpush1.msra.mxu0 %v1495
    %1787 = vmatprep.subr.mxu0 %v1498
    %1788 = vmatpush1.msra.mxu0 %v1497
    %1789 = vmatprep.subr.mxu0 %v1500
    %1790 = vmatpush1.msra.mxu0 %v1499
    %1791 = vmatprep.subr.mxu0 %v1502
    %1792 = vmatpush1.msra.mxu0 %v1501
    %1793 = vmatprep.subr.mxu0 %v1504
    %1794 = vmatpush1.msra.mxu0 %v1503
    %1795 = vmatprep.subr.mxu0 %v1506
    %1796 = vmatpush1.msra.mxu0 %v1505
    %1797 = vmatprep.subr.mxu0 %v1508
    %1798 = vmatpush1.msra.mxu0 %v1507
    %1799 = vmatprep.subr.mxu0 %v1510
    %1800 = vmatpush1.msra.mxu0 %v1509
    %1801 = vmatprep.subr.mxu0 %v1512
    %1802 = vmatpush1.msra.mxu0 %v1511
    %1803 = vmatprep.subr.mxu0 %v1514
    %1804 = vmatpush1.msra.mxu0 %v1513
    %1805 = vmatprep.subr.mxu0 %v1516
    %1806 = vmatpush1.msra.mxu0 %v1515
    %1807 = vmatprep.subr.mxu0 %v1518
    %1808 = vmatpush1.msra.mxu0 %v1517
    %1809 = vmatprep.subr.mxu0 %v1520
    %1810 = vmatpush1.msra.mxu0 %v1519
    %1811 = vmatprep.subr.mxu0 %v1522
    %1812 = vmatpush1.msra.mxu0 %v1521
    %1813 = vmatprep.subr.mxu0 %v1524
    %1814 = vmatpush1.msra.mxu0 %v1523
    %1815 = vmatprep.subr.mxu0 %v1526
    %1816 = vmatpush1.msra.mxu0 %v1525
    %1817 = vmatprep.subr.mxu0 %v1528
    %1818 = vmatpush1.msra.mxu0 %v1527
    %1819 = vmatprep.subr.mxu0 %v1530
    %1820 = vmatpush1.msra.mxu0 %v1529
    %1821 = vmatprep.subr.mxu0 %v1532
    %1822 = vmatpush1.msra.mxu0 %v1531
    %1823 = vmatprep.subr.mxu0 %v1534
    %1824 = vmatpush1.msra.mxu0 %v1533
    %1825 = vmatprep.subr.mxu0 %v1536
    %1826 = vmatpush1.msra.mxu0 %v1535
    %1827 = vmatprep.mubr.f32.mxu0 %v1301
    %1828 = vmatmul.mubr.f32.gmra.mrb[0].mxu0 %v1299
    %v1829 = vpop.f32.mrb[0].mxu0
    %v1830 = vadd.f32 %v1717, %v1829
    %v1831 = vpop.f32.mrb[0].mxu0
    %v1832 = vadd.f32 %v1719, %v1831
    %1833 = vmatprep.mubr.f32.mxu0 %v1307
    %1834 = vmatmul.mubr.f32.gmra.mrb[0].mxu0 %v1305
    %v1835 = vpop.f32.mrb[0].mxu0
    %v1836 = vadd.f32 %v1723, %v1835
    %v1837 = vpop.f32.mrb[0].mxu0
    %v1838 = vadd.f32 %v1725, %v1837
    %1839 = vmatprep.mubr.f32.mxu0 %v1313
    %1840 = vmatmul.mubr.f32.gmra.mrb[0].mxu0 %v1311
    %v1841 = vpop.f32.mrb[0].mxu0
    %v1842 = vadd.f32 %v1729, %v1841
    %v1843 = vpop.f32.mrb[0].mxu0
    %v1844 = vadd.f32 %v1731, %v1843
    %1845 = vmatprep.mubr.f32.mxu0 %v1319
    %1846 = vmatmul.mubr.f32.gmra.mrb[0].mxu0 %v1317
    %v1847 = vpop.f32.mrb[0].mxu0
    %v1848 = vadd.f32 %v1735, %v1847
    %v1849 = vpop.f32.mrb[0].mxu0
    %v1850 = vadd.f32 %v1737, %v1849
    %1851 = vmatprep.mubr.f32.mxu0 %v1325
    %1852 = vmatmul.mubr.f32.gmra.mrb[0].mxu0 %v1323
    %v1853 = vpop.f32.mrb[0].mxu0
    %v1854 = vadd.f32 %v1741, %v1853
    %v1855 = vpop.f32.mrb[0].mxu0
    %v1856 = vadd.f32 %v1743, %v1855
    %1857 = vmatprep.mubr.f32.mxu0 %v1331
    %1858 = vmatmul.mubr.f32.gmra.mrb[0].mxu0 %v1329
    %v1859 = vpop.f32.mrb[0].mxu0
    %v1860 = vadd.f32 %v1747, %v1859
    %v1861 = vpop.f32.mrb[0].mxu0
    %v1862 = vadd.f32 %v1749, %v1861
    %1863 = vmatprep.mubr.f32.mxu0 %v1337
    %1864 = vmatmul.mubr.f32.gmra.mrb[0].mxu0 %v1335
    %v1865 = vpop.f32.mrb[0].mxu0
    %v1866 = vadd.f32 %v1753, %v1865
    %v1867 = vpop.f32.mrb[0].mxu0
    %v1868 = vadd.f32 %v1755, %v1867
    %1869 = vmatprep.mubr.f32.mxu0 %v1343
    %1870 = vmatmul.mubr.f32.gmra.mrb[0].mxu0 %v1341
    %v1871 = vpop.f32.mrb[0].mxu0
    %v1872 = vadd.f32 %v1759, %v1871
    %v1873 = vpop.f32.mrb[0].mxu0
    %v1874 = vadd.f32 %v1761, %v1873
    %1875 = vdwg.mxu0
    %v1876 = vld [vmem:[%s11] sm:$0x3]
    %v1878 = vlaneseq
    %v1879 = vshrl.u32 %v1878, 7
    %v1880 = vsub.s32 0, %v1879
    %v1881 = vrot.slane %v1876, %v1880
    %v1882 = vlaneseq
    %v1883 = vshrl.u32 %v1882, 7
    %v1884 = vsub.s32 1, %v1883
    %v1885 = vrot.slane %v1876, %v1884
    %v1888 = vmul.f32 %v1830, %v1881
    %v1889 = vmul.f32 %v1832, %v1885
    %v1890 = vmul.f32 %v1836, %v1881
    %v1891 = vmul.f32 %v1838, %v1885
    %v1892 = vmul.f32 %v1842, %v1881
    %v1893 = vmul.f32 %v1844, %v1885
    %v1894 = vmul.f32 %v1848, %v1881
    %v1895 = vmul.f32 %v1850, %v1885
    %v1896 = vmul.f32 %v1854, %v1881
    %v1897 = vmul.f32 %v1856, %v1885
    %v1898 = vmul.f32 %v1860, %v1881
    %v1899 = vmul.f32 %v1862, %v1885
    %v1900 = vmul.f32 %v1866, %v1881
    %v1901 = vmul.f32 %v1868, %v1885
    %v1902 = vmul.f32 %v1872, %v1881
    %v1903 = vmul.f32 %v1874, %v1885
    %v1904 = vld [vmem:[%s12] sm:$0x3]
    %v1906 = vlaneseq
    %v1907 = vshrl.u32 %v1906, 7
    %v1908 = vsub.s32 0, %v1907
    %v1909 = vrot.slane %v1904, %v1908
    %v1910 = vlaneseq
    %v1911 = vshrl.u32 %v1910, 7
    %v1912 = vsub.s32 1, %v1911
    %v1913 = vrot.slane %v1904, %v1912
    %v1916 = vadd.f32 %v1888, %v1909
    %v1917 = vadd.f32 %v1889, %v1913
    %v1918 = vadd.f32 %v1890, %v1909
    %v1919 = vadd.f32 %v1891, %v1913
    %v1920 = vadd.f32 %v1892, %v1909
    %v1921 = vadd.f32 %v1893, %v1913
    %v1922 = vadd.f32 %v1894, %v1909
    %v1923 = vadd.f32 %v1895, %v1913
    %v1924 = vadd.f32 %v1896, %v1909
    %v1925 = vadd.f32 %v1897, %v1913
    %v1926 = vadd.f32 %v1898, %v1909
    %v1927 = vadd.f32 %v1899, %v1913
    %v1928 = vadd.f32 %v1900, %v1909
    %v1929 = vadd.f32 %v1901, %v1913
    %v1930 = vadd.f32 %v1902, %v1909
    %v1931 = vadd.f32 %v1903, %v1913
    %vm1932 = vcmp.ge.f32.partialorder %v1916, 0.0
    %vm1933 = vcmp.ge.f32.partialorder %v1917, 0.0
    %vm1934 = vcmp.ge.f32.partialorder %v1918, 0.0
    %vm1935 = vcmp.ge.f32.partialorder %v1919, 0.0
    %vm1936 = vcmp.ge.f32.partialorder %v1920, 0.0
    %vm1937 = vcmp.ge.f32.partialorder %v1921, 0.0
    %vm1938 = vcmp.ge.f32.partialorder %v1922, 0.0
    %vm1939 = vcmp.ge.f32.partialorder %v1923, 0.0
    %vm1940 = vcmp.ge.f32.partialorder %v1924, 0.0
    %vm1941 = vcmp.ge.f32.partialorder %v1925, 0.0
    %vm1942 = vcmp.ge.f32.partialorder %v1926, 0.0
    %vm1943 = vcmp.ge.f32.partialorder %v1927, 0.0
    %vm1944 = vcmp.ge.f32.partialorder %v1928, 0.0
    %vm1945 = vcmp.ge.f32.partialorder %v1929, 0.0
    %vm1946 = vcmp.ge.f32.partialorder %v1930, 0.0
    %vm1947 = vcmp.ge.f32.partialorder %v1931, 0.0
    %v1948 = vmul.f32 %v1916, 0.01
    %v1949 = vmul.f32 %v1917, 0.01
    %v1950 = vmul.f32 %v1918, 0.01
    %v1951 = vmul.f32 %v1919, 0.01
    %v1952 = vmul.f32 %v1920, 0.01
    %v1953 = vmul.f32 %v1921, 0.01
    %v1954 = vmul.f32 %v1922, 0.01
    %v1955 = vmul.f32 %v1923, 0.01
    %v1956 = vmul.f32 %v1924, 0.01
    %v1957 = vmul.f32 %v1925, 0.01
    %v1958 = vmul.f32 %v1926, 0.01
    %v1959 = vmul.f32 %v1927, 0.01
    %v1960 = vmul.f32 %v1928, 0.01
    %v1961 = vmul.f32 %v1929, 0.01
    %v1962 = vmul.f32 %v1930, 0.01
    %v1963 = vmul.f32 %v1931, 0.01
    %v1964 = vsel %vm1932, %v1916, %v1948
    %v1965 = vsel %vm1933, %v1917, %v1949
    %v1966 = vsel %vm1934, %v1918, %v1950
    %v1967 = vsel %vm1935, %v1919, %v1951
    %v1968 = vsel %vm1936, %v1920, %v1952
    %v1969 = vsel %vm1937, %v1921, %v1953
    %v1970 = vsel %vm1938, %v1922, %v1954
    %v1971 = vsel %vm1939, %v1923, %v1955
    %v1972 = vsel %vm1940, %v1924, %v1956
    %v1973 = vsel %vm1941, %v1925, %v1957
    %v1974 = vsel %vm1942, %v1926, %v1958
    %v1975 = vsel %vm1943, %v1927, %v1959
    %v1976 = vsel %vm1944, %v1928, %v1960
    %v1977 = vsel %vm1945, %v1929, %v1961
    %v1978 = vsel %vm1946, %v1930, %v1962
    %v1979 = vsel %vm1947, %v1931, %v1963
    %1980 = vst [vmem:[%s13] sm:$0xff] %v1964
    %1981 = vst [vmem:[%s13 + $0x8] sm:$0xff] %v1965
    %1982 = vst [vmem:[%s13 + $0x10] sm:$0xff] %v1966
    %1983 = vst [vmem:[%s13 + $0x18] sm:$0xff] %v1967
    %1984 = vst [vmem:[%s13 + $0x20] sm:$0xff] %v1968
    %1985 = vst [vmem:[%s13 + $0x28] sm:$0xff] %v1969
    %1986 = vst [vmem:[%s13 + $0x30] sm:$0xff] %v1970
    %1987 = vst [vmem:[%s13 + $0x38] sm:$0xff] %v1971
    %1988 = vst [vmem:[%s13 + $0x40] sm:$0xff] %v1972
    %1989 = vst [vmem:[%s13 + $0x48] sm:$0xff] %v1973
    %1990 = vst [vmem:[%s13 + $0x50] sm:$0xff] %v1974
    %1991 = vst [vmem:[%s13 + $0x58] sm:$0xff] %v1975
    %1992 = vst [vmem:[%s13 + $0x60] sm:$0xff] %v1976
    %1993 = vst [vmem:[%s13 + $0x68] sm:$0xff] %v1977
    %1994 = vst [vmem:[%s13 + $0x70] sm:$0xff] %v1978
    %1995 = vst [vmem:[%s13 + $0x78] sm:$0xff] %v1979
    // Predicated region
    $region62: #{upconv_forward.1} parent=1 // pred_check
      _
    $region63: #{upconv_forward.1} parent=1 // pred_check_branch
      %1997 = sbr.rel (0) target = $region65
    $region64: #{upconv_forward.1} parent=1 // pred_region
      _
    $region65: #{upconv_forward.1} parent=1 // pred_fallthru
      _
    // Predicated region
    $region66: #{upconv_forward.1} parent=1 // pred_check
      _
    $region67: #{upconv_forward.1} parent=1 // pred_check_branch
      %1999 = sbr.rel (0) target = $region69
    $region68: #{upconv_forward.1} parent=1 // pred_region
      _
    $region69: #{upconv_forward.1} parent=1 // pred_fallthru
      _
    %2000 = vsyncpa [#allocation3], 1
    %2001 = vsyncpa [#allocation5], 1

</llo_original>
